<compile_context>
chip_gen: v5e
topology: v5e:2x2
jax: 0.10.0
libtpu: 0.0.40
codegen_flags: <defaults>
</compile_context>

<pallas_src>
import functools

import jax
import jax.numpy as jnp
import numpy as np
from jax.experimental import pallas as pl
from jax.experimental.pallas import tpu as pltpu


def _round_up(x, m):
    return ((x + m - 1) // m) * m


def _block_diag_conv1x1_kernel(w_ref, x_ref, o_ref):
    # w_ref: (out_channels, r_dim)    block-diagonal grouped-conv weight (VMEM resident)
    # x_ref: (r_dim, tile_hw)         lane-dense input tile
    # o_ref: (out_channels, tile_hw)  lane-dense output tile
    o_ref[...] = jnp.dot(
        w_ref[...], x_ref[...], preferred_element_type=jnp.float32
    ).astype(o_ref.dtype)


def _make_block_diag_weight(weight, heads, out_channels, r_dim):
    # weight: (out_channels, r_dim // heads, 1, 1) -> block-diagonal (out_channels, r_dim)
    cg_in = r_dim // heads
    cg_out = out_channels // heads
    w2d = weight[:, :, 0, 0]
    w_blocks = w2d.reshape(heads, cg_out, cg_in)
    eye = jnp.eye(heads, dtype=w2d.dtype)
    return jnp.einsum("hoc,hg->hogc", w_blocks, eye).reshape(out_channels, r_dim)


def xl_positional_encoding_fwd(
    r,
    weight,
    u,
    v,
    *,
    heads,
    out_channels,
    min_hw_for_pallas=4096,
    vmem_tile_budget_bytes=20 * 1024 * 1024,
):
    """r: (1, r_dim, H, W) NCHW.  weight: (out_channels, r_dim//heads, 1, 1)."""
    N, r_dim, H, W = r.shape
    assert N == 1, "view(1, heads, ...) in the reference requires batch == 1"
    assert r_dim % heads == 0 and out_channels % heads == 0
    cg_in = r_dim // heads
    cg_out = out_channels // heads
    hw = H * W

    if hw < min_hw_for_pallas:
        # Tiny spatial extent: a pallas_call is pure fixed overhead here; XLA
        # fuses this trivially.
        x3 = r.reshape(heads, cg_in, hw)
        w3 = weight.reshape(heads, cg_out, cg_in)
        out = jnp.einsum(
            "hoc,hcn->hon", w3, x3, preferred_element_type=jnp.float32
        ).astype(r.dtype)
        return out.reshape(1, heads, cg_out, 1, 1, hw), u, v

    # ---- wrapper-side layout glue (tiny, weight-only) -----------------------
    w_bd = _make_block_diag_weight(weight, heads, out_channels, r_dim).astype(r.dtype)
    # NCHW (1, r_dim, H, W) -> (r_dim, HW): contiguous view, no data movement.
    x2d = r.reshape(r_dim, hw)

    # ---- tile selection ------------------------------------------------------
    dtype_size = jnp.dtype(r.dtype).itemsize
    bytes_per_col = (r_dim + out_channels) * dtype_size
    # Largest lane-dense tile whose double-buffered in+out footprint fits the
    # budget (safe on all generations, incl. v7x's 64 MiB physical VMEM).
    max_tile = max(128, (vmem_tile_budget_bytes // (2 * bytes_per_col)) // 128 * 128)
    # Aim for >= 2 tiles so the "parallel" grid axis can be megacore-sharded (v7x).
    tile_hw = min(max_tile, _round_up(pl.cdiv(hw, 2), 128))
    num_tiles = pl.cdiv(hw, tile_hw)

    # Explicit scoped-VMEM request: what we actually use + slack.  This raises
    # v5e's 16 MiB default when large tiles need it, and stays far below the
    # 64 MiB physical cap on v7x.
    vmem_limit = max(
        2 * bytes_per_col * tile_hw
        + 2 * out_channels * r_dim * dtype_size
        + (8 << 20),
        16 << 20,
    )

    out2d = pl.pallas_call(
        _block_diag_conv1x1_kernel,
        out_shape=jax.ShapeDtypeStruct((out_channels, hw), r.dtype),
        grid=(num_tiles,),
        in_specs=[
            # Weight: full block, constant index_map -> fetched once, VMEM resident.
            pl.BlockSpec((out_channels, r_dim), lambda j: (0, 0)),
            # Input: lane-dense HW tiles (boundary block partially valid).
            pl.BlockSpec((r_dim, tile_hw), lambda j: (0, j)),
        ],
        out_specs=pl.BlockSpec((out_channels, tile_hw), lambda j: (0, j)),
        compiler_params=pltpu.CompilerParams(
            dimension_semantics=(("parallel",) if num_tiles > 1 else ("arbitrary",)),
            vmem_limit_bytes=int(vmem_limit),
        ),
    )(w_bd, x2d)

    # Grouped-conv output channels are group-major, so this reshape matches
    # torch's .view(1, heads, cg_out, 1, 1, -1) exactly.
    r_out = out2d.reshape(1, heads, cg_out, 1, 1, hw)
    return r_out, u, v


def _reference(r, weight, heads, out_channels):
    N, r_dim, H, W = r.shape
    cg_in = r_dim // heads
    cg_out = out_channels // heads
    x3 = r.astype(jnp.float32).reshape(heads, cg_in, H * W)
    w3 = weight.astype(jnp.float32).reshape(heads, cg_out, cg_in)
    return jnp.einsum("hoc,hcn->hon", w3, x3).reshape(1, heads, cg_out, 1, 1, H * W)


if __name__ == "__main__":
    out_channels = 32
    heads = 4
    r_dim = 16

    key = jax.random.PRNGKey(0)
    k_r, k_w, k_u, k_v = jax.random.split(key, 4)

    # Module parameters (shapes from __init__).
    weight = jax.random.normal(
        k_w, (out_channels, r_dim // heads, 1, 1), dtype=jnp.float32
    )
    u = jax.random.normal(
        k_u, (1, heads, out_channels // heads, 1, 1, 1), dtype=jnp.float32
    )
    v = jax.random.normal(
        k_v, (1, heads, out_channels // heads, 1, 1, 1), dtype=jnp.float32
    )

    fwd = jax.jit(
        functools.partial(
            xl_positional_encoding_fwd, heads=heads, out_channels=out_channels
        )
    )

    # ---- 1) Pallas path: hw = 100*100 = 10000 -> 2 parallel tiles of 5120
    #         columns with a masked boundary block (no pad / no slice). ---------
    H = W = 100
    r = jax.random.normal(k_r, (1, r_dim, H, W), dtype=jnp.float32)
    r_out, u_out, v_out = fwd(r, weight, u, v)
    jax.block_until_ready((r_out, u_out, v_out))

    ref = _reference(r, weight, heads, out_channels)
    assert r_out.shape == (1, heads, out_channels // heads, 1, 1, H * W)
    assert u_out.shape == u.shape and v_out.shape == v.shape
    np.testing.assert_allclose(np.asarray(r_out), np.asarray(ref), rtol=1e-5, atol=1e-5)
    np.testing.assert_allclose(np.asarray(u_out), np.asarray(u))
    np.testing.assert_allclose(np.asarray(v_out), np.asarray(v))

    # ---- 2) Same Pallas path with bf16 I/O (MXU takes bf16 on all gens;
    #         accumulation stays f32 in-kernel). --------------------------------
    r_bf = r.astype(jnp.bfloat16)
    w_bf = weight.astype(jnp.bfloat16)
    r_out_bf, _, _ = fwd(r_bf, w_bf, u, v)
    jax.block_until_ready(r_out_bf)
    np.testing.assert_allclose(
        np.asarray(r_out_bf, dtype=np.float32), np.asarray(ref), rtol=5e-2, atol=1e-1
    )

    # ---- 3) Tiny-HW fast path (hw = 64): plain einsum, no pallas_call overhead.
    H2 = W2 = 8
    r_small = jax.random.normal(k_r, (1, r_dim, H2, W2), dtype=jnp.float32)
    r_out_s, _, _ = xl_positional_encoding_fwd(
        r_small, weight, u, v, heads=heads, out_channels=out_channels
    )
    jax.block_until_ready(r_out_s)
    ref_s = _reference(r_small, weight, heads, out_channels)
    np.testing.assert_allclose(
        np.asarray(r_out_s), np.asarray(ref_s), rtol=1e-5, atol=1e-5
    )

    print("KERNEL_OK")
</pallas_src>

<mosaic_0001>
module attributes {stable_mosaic.version = 11 : i64} {
  func.func @_block_diag_conv1x1_kernel(%arg0: i32, %arg1: memref<32x16xf32, #tpu.memory_space<vmem>>, %arg2: memref<16x5120xf32, #tpu.memory_space<vmem>>, %arg3: memref<32x5120xf32, #tpu.memory_space<vmem>>) attributes {dimension_semantics = [#tpu.dimension_semantics<parallel>], iteration_bounds = array<i64: 2>, scalar_prefetch = 0 : i64, scratch_operands = 0 : i64, tpu.core_type = #tpu.core_type<tc>, window_params = [{pipeline_mode = #tpu.pipeline_mode<synchronous>, transform_indices = @transform_0, window_bounds = array<i64: 32, 16>}, {transform_indices = @transform_1, window_bounds = array<i64: 16, 5120>}, {transform_indices = @transform_2, window_bounds = array<i64: 32, 5120>}]} {
    %c0 = arith.constant 0 : index
    %c0_0 = arith.constant 0 : index
    %0 = vector.load %arg1[%c0, %c0_0] : memref<32x16xf32, #tpu.memory_space<vmem>>, vector<32x16xf32>
    %c0_1 = arith.constant 0 : index
    %c0_2 = arith.constant 0 : index
    %1 = vector.load %arg2[%c0_1, %c0_2] : memref<16x5120xf32, #tpu.memory_space<vmem>>, vector<16x5120xf32>
    %cst = arith.constant dense<0.000000e+00> : vector<32x5120xf32>
    %2 = tpu.matmul %0, %1, %cst {dimension_numbers = #tpu.dot_dimension_numbers<[1], [0], [0], [1], [0, 0, 1, 1], [], []>} : vector<32x16xf32>, vector<16x5120xf32>, vector<32x5120xf32> -> vector<32x5120xf32>
    %c0_3 = arith.constant 0 : index
    %c0_4 = arith.constant 0 : index
    %3 = vector.load %arg3[%c0_3, %c0_4] : memref<32x5120xf32, #tpu.memory_space<vmem>>, vector<32x5120xf32>
    tpu.vector_store %arg3[%c0_3, %c0_4], %2 {strides = array<i32>} : memref<32x5120xf32, #tpu.memory_space<vmem>>, vector<32x5120xf32>,
    return
  }
  func.func @transform_0(%arg0: i32) -> (i32, i32) {
    %c0_i32 = arith.constant 0 : i32
    %c0_i32_0 = arith.constant 0 : i32
    %c0_i32_1 = arith.constant 0 : i32
    return %c0_i32, %c0_i32_0 : i32, i32
  }
  func.func @transform_1(%arg0: i32) -> (i32, i32) {
    %c0_i32 = arith.constant 0 : i32
    %c0_i32_0 = arith.constant 0 : i32
    return %c0_i32, %arg0 : i32, i32
  }
  func.func @transform_2(%arg0: i32) -> (i32, i32) {
    %c0_i32 = arith.constant 0 : i32
    %c0_i32_0 = arith.constant 0 : i32
    return %c0_i32, %arg0 : i32, i32
  }
}

</mosaic_0001>

<llo_original>
// kernel: squeeze.1
$region0: #{squeeze.1}
  %s0 = inlined_call_operand.vmem [shape: f32[32,4], index: 0, kind: input, shape index: {}]
  %s1 = inlined_call_operand.vmem [shape: f32[4,8,4], index: 1, kind: output, shape index: {}]
  $region1: #{squeeze.1} parent=0
    #allocation0 [shape = 'u8[16384]{0}', space=vmem, size = 0x4000, scoped, tag = 'scoped mem for output reshape']
    #allocation1 [shape = 'u8[4096]{0}', space=vmem, size = 0x1000, scoped, tag = 'scoped mem for input reshape']
    %s3 = ssub.s32 16, 1
    %v4 = vld [vmem:[%s0] sm:%s3]
    %5 = vst [vmem:[#allocation1] sm:%s3] %v4
    %v6 = vld [vmem:[#allocation1] sm:$0xf]
    %vm7 = vcmask 64512
    %8 = vst.msk [vmem:[#allocation0] ss:$8 sm:$0xf] %vm7, %v6
    %v9 = vld [vmem:[#allocation1] sm:$0xf]
    %10 = vrot.lane.b32.xlu0 %v9, 120
    %v11 = vpop.permute.xlu0 %10
    %vm12 = vcmask 64512
    %s13 = scalar_lea.vmem [#allocation0], 1
    %14 = vst.msk [vmem:[%s13] ss:$8 sm:$0xf] %vm12, %v11
    %v15 = vld [vmem:[#allocation1] sm:$0xf]
    %16 = vrot.lane.b32.xlu0 %v15, 112
    %v17 = vpop.permute.xlu0 %16
    %vm18 = vcmask 64512
    %s19 = scalar_lea.vmem [#allocation0], 2
    %20 = vst.msk [vmem:[%s19] ss:$8 sm:$0xf] %vm18, %v17
    %v21 = vld [vmem:[#allocation1] sm:$0xf]
    %22 = vrot.lane.b32.xlu0 %v21, 104
    %v23 = vpop.permute.xlu0 %22
    %vm24 = vcmask 64512
    %s25 = scalar_lea.vmem [#allocation0], 3
    %26 = vst.msk [vmem:[%s25] ss:$8 sm:$0xf] %vm24, %v23
    %s28 = ssub.s32 16, 1
    %v29 = vld [vmem:[#allocation0] sm:%s28]
    %s31 = ssub.s32 16, 1
    %32 = vst [vmem:[%s1] sm:%s31] %v29
    %s33 = scalar_lea.vmem [#allocation0], 8
    %v34 = vld [vmem:[%s33] sm:%s28]
    %s36 = ssub.s32 16, 1
    %s37 = scalar_lea.vmem %s1, 4
    %38 = vst [vmem:[%s37] sm:%s36] %v34
    %s39 = scalar_lea.vmem [#allocation0], 16
    %v40 = vld [vmem:[%s39] sm:%s28]
    %s42 = ssub.s32 16, 1
    %s43 = scalar_lea.vmem %s1, 8
    %44 = vst [vmem:[%s43] sm:%s42] %v40
    %s45 = scalar_lea.vmem [#allocation0], 24
    %v46 = vld [vmem:[%s45] sm:%s28]
    %s48 = ssub.s32 16, 1
    %s49 = scalar_lea.vmem %s1, 12
    %50 = vst [vmem:[%s49] sm:%s48] %v46

// kernel: xl_positional_encoding_fwd.1
$region0: #{xl_positional_encoding_fwd.1}
  #allocation0 [shape = 'u32[]', space=smem, size = 0x4, offset = 0x4, fixed_abs, tag = 'smem constant byte address 0x4 - core index']
  #allocation1 [shape = 'u32[72,128]{1,0:T(1,128)}', space=vmem, size = 0x9000, scoped, tag = 'internal scratch']
  %s0 = inlined_call_operand.vmem [shape: f32[32,16], index: 0, kind: input, shape index: {}]
  %s1 = inlined_call_operand.vmem [shape: f32[16,10000], index: 1, kind: input, shape index: {}]
  %s2 = inlined_call_operand.vmem [shape: f32[32,10000], index: 2, kind: output, shape index: {}]
  %s3 = sld [smem:[#allocation0]]
  $region169: #{xl_positional_encoding_fwd.1} parent=0
    _
  %s5 = ssub.s32 1, %s3
  %s6 = scalar_select 0, %s5, %s3
  $region1: #{xl_positional_encoding_fwd.1} parent=0
    #allocation2 [shape = 'u8[655360]{0}', space=vmem, size = 0xa0000, scoped, tag = 'input window, operand 1']
    #allocation3 [shape = 'u8[1310720]{0}', space=vmem, size = 0x140000, scoped, tag = 'output window, operand 0']
    loop: start=0, step=1, limit=4
    $region2: #{xl_positional_encoding_fwd.1} parent=1 // loop_pre_header
      _
    $region3: #{xl_positional_encoding_fwd.1} parent=1 // loop_header
      %s8 = sphi 0, %s12
      %p9 = scmp.ge.s32.totalorder %s8, 4
      %s16 = sphi 0, %s16
      %s18 = sphi 0, %s16
      %s19 = sphi 0, %s18
      %s33 = sphi 0, %s19
      %s39 = sphi 0, %s41
      %s42 = sphi 0, %s39
      %s43 = sphi 0, %s42
      %s59 = sphi 0, %s43
      %s65 = sphi 0, %s67
      %s68 = sphi 0, %s65
      %s69 = sphi 0, %s68
      %s85 = sphi 0, %s69
    $region4: #{xl_positional_encoding_fwd.1} parent=1 // loop_header_branch
      %11 = sbr.rel (%p9) target = $region8
    $region5: #{xl_positional_encoding_fwd.1} parent=1 // loop_body
      %s13 = ssub.s32 %s8, 1
      %s14 = ssub.s32 %s8, 2
      %s15 = sadd.s32 %s8, 1
      %s17 = sadd.s32 %s16, 1
      %p20 = scmp.eq.s32.totalorder %s8, 1
      %p21 = scmp.ne.s32.totalorder %s16, %s18
      %p22 = scmp.eq.s32.totalorder %s8, 0
      %p23 = por %p21, %p22
      %p24 = scmp.ne.s32.totalorder %s16, %s18
      %p25 = scmp.eq.s32.totalorder %s13, 1
      %p26 = por %p24, %p25
      %p27 = scmp.ne.s32.totalorder %s18, %s19
      %p28 = scmp.eq.s32.totalorder %s13, 0
      %p29 = por %p27, %p28
      %p30 = scmp.ne.s32.totalorder %s18, %s19
      %p31 = scmp.eq.s32.totalorder %s14, 1
      %p32 = por %p30, %p31
      %p34 = scmp.ne.s32.totalorder %s19, %s33
      %p35 = scmp.eq.s32.totalorder %s14, 0
      %p36 = por %p34, %p35
      %s37 = ssub.s32 %s8, %s15
      %p38 = scmp.eq.s32.totalorder %s37, 0
      %s40 = sadd.s32 %s39, 1
      %s41 = scalar_select %p38, %s39, %s40
      %p44 = pneg %p38
      %p45 = scmp.eq.s32.totalorder %s8, 1
      %p46 = por %p44, %p45
      %p47 = scmp.ne.s32.totalorder %s39, %s42
      %p48 = scmp.eq.s32.totalorder %s8, 0
      %p49 = por %p47, %p48
      %p50 = scmp.ne.s32.totalorder %s39, %s42
      %p51 = scmp.eq.s32.totalorder %s13, 1
      %p52 = por %p50, %p51
      %p53 = scmp.ne.s32.totalorder %s42, %s43
      %p54 = scmp.eq.s32.totalorder %s13, 0
      %p55 = por %p53, %p54
      %p56 = scmp.ne.s32.totalorder %s42, %s43
      %p57 = scmp.eq.s32.totalorder %s14, 1
      %p58 = por %p56, %p57
      %p60 = scmp.ne.s32.totalorder %s43, %s59
      %p61 = scmp.eq.s32.totalorder %s14, 0
      %p62 = por %p60, %p61
      %s63 = ssub.s32 %s8, %s15
      %p64 = scmp.eq.s32.totalorder %s63, 0
      %s66 = sadd.s32 %s65, 1
      %s67 = scalar_select %p64, %s65, %s66
      %p70 = pneg %p64
      %p71 = scmp.eq.s32.totalorder %s8, 1
      %p72 = por %p70, %p71
      %p73 = scmp.ne.s32.totalorder %s65, %s68
      %p74 = scmp.eq.s32.totalorder %s8, 0
      %p75 = por %p73, %p74
      %p76 = scmp.ne.s32.totalorder %s65, %s68
      %p77 = scmp.eq.s32.totalorder %s13, 1
      %p78 = por %p76, %p77
      %p79 = scmp.ne.s32.totalorder %s68, %s69
      %p80 = scmp.eq.s32.totalorder %s13, 0
      %p81 = por %p79, %p80
      %p82 = scmp.ne.s32.totalorder %s68, %s69
      %p83 = scmp.eq.s32.totalorder %s14, 1
      %p84 = por %p82, %p83
      %p86 = scmp.ne.s32.totalorder %s69, %s85
      %p87 = scmp.eq.s32.totalorder %s14, 0
      %p88 = por %p86, %p87
      %p89 = scmp.le.s32.totalorder 1, %s8
      %p90 = scmp.lt.s32.totalorder %s8, 3
      %p91 = pnand %p89, %p90
      %p92 = pneg %p91
      // Predicated region
      $region9: #{xl_positional_encoding_fwd.1} parent=5 // pred_check
        _
      $region10: #{xl_positional_encoding_fwd.1} parent=5 // pred_check_branch
        %94 = sbr.rel (%p91) target = $region12
      $region11: #{xl_positional_encoding_fwd.1} parent=5 // pred_region
        %s95 = ssub.s32 %s8, 1
        // Predicated region
        $region13: #{xl_positional_encoding_fwd.1} parent=11 // pred_check
          %p96 = pneg %p29
        $region14: #{xl_positional_encoding_fwd.1} parent=11 // pred_check_branch
          %98 = sbr.rel (%p96) target = $region16
        $region15: #{xl_positional_encoding_fwd.1} parent=11 // pred_region
          _
        $region16: #{xl_positional_encoding_fwd.1} parent=11 // pred_fallthru
          _
      $region12: #{xl_positional_encoding_fwd.1} parent=5 // pred_fallthru
        _
      %p99 = scmp.lt.s32.totalorder %s8, 2
      // Predicated region
      $region17: #{xl_positional_encoding_fwd.1} parent=5 // pred_check
        %p100 = pneg %p99
      $region18: #{xl_positional_encoding_fwd.1} parent=5 // pred_check_branch
        %102 = sbr.rel (%p100) target = $region20
      $region19: #{xl_positional_encoding_fwd.1} parent=5 // pred_region
        // Predicated region
        $region21: #{xl_positional_encoding_fwd.1} parent=19 // pred_check
          %p103 = pneg %p49
        $region22: #{xl_positional_encoding_fwd.1} parent=19 // pred_check_branch
          %105 = sbr.rel (%p103) target = $region24
        $region23: #{xl_positional_encoding_fwd.1} parent=19 // pred_region
          %s106 = sand.u32 %s39, 1
          %s107 = sand.u32 %s39, 1
          %s108 = smul.addr %s107, 640
          %s109 = scalar_lea.vmem [#allocation2], %s108
          %s110 = smul.u32 40, %s8
          %s111 = ssub.s32 79, %s110
          %p112 = scmp.lt.s32.totalorder %s111, 40
          %s113 = scalar_select %p112, %s111, 40
          %s114 = smul.u32 16, %s113
          %p115 = scmp.ne.s32.totalorder 0, %s114
          %s116 = smul.addr %s110, 8
          %s117 = scalar_lea.vmem %s1, %s116
          %s118 = smul.u32 %s113, 8
          // Predicated region
          $region25: #{xl_positional_encoding_fwd.1} parent=23 // pred_check
            %p119 = pneg %p115
          $region26: #{xl_positional_encoding_fwd.1} parent=23 // pred_check_branch
            %121 = sbr.rel (%p119) target = $region28
          $region27: #{xl_positional_encoding_fwd.1} parent=23 // pred_region
            %p122 = scmp.lt.u32.totalorder %s118, 8
            %p123 = pneg %p122
            // Predicated region
            $region29: #{xl_positional_encoding_fwd.1} parent=27 // pred_check
              _
            $region30: #{xl_positional_encoding_fwd.1} parent=27 // pred_check_branch
              %125 = sbr.rel (%p122) target = $region32
            $region31: #{xl_positional_encoding_fwd.1} parent=27 // pred_region
              %s143 = sand.u32 %s118, 7
              %p144 = scmp.eq.s32.totalorder %s143, 0
              // Predicated region
              $region44: #{xl_positional_encoding_fwd.1} parent=31 // pred_check
                %p145 = pneg %p144
              $region45: #{xl_positional_encoding_fwd.1} parent=31 // pred_check_branch
                %147 = sbr.rel (%p145) target = $region47
              $region46: #{xl_positional_encoding_fwd.1} parent=31 // pred_region
                %s148 = sshrl.u32 %s118, 3
                %s149 = sshrl.u32 %s148, 4
                // While loop
                $region48: #{xl_positional_encoding_fwd.1} parent=46 // loop_pre_header
                  _
                $region49: #{xl_positional_encoding_fwd.1} parent=46 // loop_header
                  %s151 = sphi 0, %s153
                  %p152 = scmp.ge.s32.totalorder %s151, %s149
                  %s156 = sphi 0, %s225
                  %s157 = sphi %s117, %s228
                  %s158 = sphi %s109, %s229
                $region50: #{xl_positional_encoding_fwd.1} parent=46 // loop_header_branch
                  %155 = sbr.rel (%p152) target = $region54
                $region51: #{xl_positional_encoding_fwd.1} parent=46 // loop_body
                  %v159 = vld [vmem:[%s157] sm:$0xff]
                  %160 = vst [vmem:[%s158] sm:$0xff] %v159
                  %v161 = vld [vmem:[%s157 + $0x8] sm:$0xff]
                  %162 = vst [vmem:[%s158 + $0x8] sm:$0xff] %v161
                  %v163 = vld [vmem:[%s157 + $0x10] sm:$0xff]
                  %164 = vst [vmem:[%s158 + $0x10] sm:$0xff] %v163
                  %v165 = vld [vmem:[%s157 + $0x18] sm:$0xff]
                  %166 = vst [vmem:[%s158 + $0x18] sm:$0xff] %v165
                  %v167 = vld [vmem:[%s157 + $0x20] sm:$0xff]
                  %168 = vst [vmem:[%s158 + $0x20] sm:$0xff] %v167
                  %v169 = vld [vmem:[%s157 + $0x28] sm:$0xff]
                  %170 = vst [vmem:[%s158 + $0x28] sm:$0xff] %v169
                  %v171 = vld [vmem:[%s157 + $0x30] sm:$0xff]
                  %172 = vst [vmem:[%s158 + $0x30] sm:$0xff] %v171
                  %v173 = vld [vmem:[%s157 + $0x38] sm:$0xff]
                  %174 = vst [vmem:[%s158 + $0x38] sm:$0xff] %v173
                  %v175 = vld [vmem:[%s157 + $0x40] sm:$0xff]
                  %176 = vst [vmem:[%s158 + $0x40] sm:$0xff] %v175
                  %v177 = vld [vmem:[%s157 + $0x48] sm:$0xff]
                  %178 = vst [vmem:[%s158 + $0x48] sm:$0xff] %v177
                  %v179 = vld [vmem:[%s157 + $0x50] sm:$0xff]
                  %180 = vst [vmem:[%s158 + $0x50] sm:$0xff] %v179
                  %v181 = vld [vmem:[%s157 + $0x58] sm:$0xff]
                  %182 = vst [vmem:[%s158 + $0x58] sm:$0xff] %v181
                  %v183 = vld [vmem:[%s157 + $0x60] sm:$0xff]
                  %184 = vst [vmem:[%s158 + $0x60] sm:$0xff] %v183
                  %v185 = vld [vmem:[%s157 + $0x68] sm:$0xff]
                  %186 = vst [vmem:[%s158 + $0x68] sm:$0xff] %v185
                  %v187 = vld [vmem:[%s157 + $0x70] sm:$0xff]
                  %188 = vst [vmem:[%s158 + $0x70] sm:$0xff] %v187
                  %v189 = vld [vmem:[%s157 + $0x78] sm:$0xff]
                  %190 = vst [vmem:[%s158 + $0x78] sm:$0xff] %v189
                  %v191 = vld [vmem:[%s157 + $0x278] sm:$0xff]
                  %192 = vst [vmem:[%s158 + $0x140] sm:$0xff] %v191
                  %v193 = vld [vmem:[%s157 + $0x280] sm:$0xff]
                  %194 = vst [vmem:[%s158 + $0x148] sm:$0xff] %v193
                  %v195 = vld [vmem:[%s157 + $0x288] sm:$0xff]
                  %196 = vst [vmem:[%s158 + $0x150] sm:$0xff] %v195
                  %v197 = vld [vmem:[%s157 + $0x290] sm:$0xff]
                  %198 = vst [vmem:[%s158 + $0x158] sm:$0xff] %v197
                  %v199 = vld [vmem:[%s157 + $0x298] sm:$0xff]
                  %200 = vst [vmem:[%s158 + $0x160] sm:$0xff] %v199
                  %v201 = vld [vmem:[%s157 + $0x2a0] sm:$0xff]
                  %202 = vst [vmem:[%s158 + $0x168] sm:$0xff] %v201
                  %v203 = vld [vmem:[%s157 + $0x2a8] sm:$0xff]
                  %204 = vst [vmem:[%s158 + $0x170] sm:$0xff] %v203
                  %v205 = vld [vmem:[%s157 + $0x2b0] sm:$0xff]
                  %206 = vst [vmem:[%s158 + $0x178] sm:$0xff] %v205
                  %v207 = vld [vmem:[%s157 + $0x2b8] sm:$0xff]
                  %208 = vst [vmem:[%s158 + $0x180] sm:$0xff] %v207
                  %v209 = vld [vmem:[%s157 + $0x2c0] sm:$0xff]
                  %210 = vst [vmem:[%s158 + $0x188] sm:$0xff] %v209
                  %v211 = vld [vmem:[%s157 + $0x2c8] sm:$0xff]
                  %212 = vst [vmem:[%s158 + $0x190] sm:$0xff] %v211
                  %v213 = vld [vmem:[%s157 + $0x2d0] sm:$0xff]
                  %214 = vst [vmem:[%s158 + $0x198] sm:$0xff] %v213
                  %v215 = vld [vmem:[%s157 + $0x2d8] sm:$0xff]
                  %216 = vst [vmem:[%s158 + $0x1a0] sm:$0xff] %v215
                  %v217 = vld [vmem:[%s157 + $0x2e0] sm:$0xff]
                  %218 = vst [vmem:[%s158 + $0x1a8] sm:$0xff] %v217
                  %v219 = vld [vmem:[%s157 + $0x2e8] sm:$0xff]
                  %220 = vst [vmem:[%s158 + $0x1b0] sm:$0xff] %v219
                  %v221 = vld [vmem:[%s157 + $0x2f0] sm:$0xff]
                  %222 = vst [vmem:[%s158 + $0x1b8] sm:$0xff] %v221
                  %s223 = sadd.s32 1, %s156
                  %p224 = scmp.ge.s32.totalorder %s223, %s149
                  %s225 = scalar_select %p224, 0, %s223
                  %s226 = smul.u32 %s225, 128
                  %s227 = smul.u32 %s225, 128
                  %s228 = scalar_lea.vmem %s117, %s226
                  %s229 = scalar_lea.vmem %s109, %s227 [#allocation2]
                $region52: #{xl_positional_encoding_fwd.1} parent=46 // loop_footer
                  %s153 = sadd.s32 %s151, 1
                $region53: #{xl_positional_encoding_fwd.1} parent=46 // loop_footer_branch
                  %150 = sbr.rel target = $region49
                $region54: #{xl_positional_encoding_fwd.1} parent=46 // loop_exit
                  _
                %s230 = sshrl.u32 %s148, 4
                %s231 = sand.u32 %s148, 15
                %s232 = smul.u32 %s230, 16
                %s233 = smul.u32 8, %s232
                %s234 = scalar_lea.vmem %s117, %s233
                %s235 = smul.u32 8, %s232
                %s236 = scalar_lea.vmem %s109, %s235 [#allocation2]
                // While loop
                $region55: #{xl_positional_encoding_fwd.1} parent=46 // loop_pre_header
                  _
                $region56: #{xl_positional_encoding_fwd.1} parent=46 // loop_header
                  %s238 = sphi 0, %s240
                  %p239 = scmp.ge.s32.totalorder %s238, %s231
                  %s243 = sphi 0, %s252
                  %s244 = sphi %s234, %s255
                  %s245 = sphi %s236, %s256
                $region57: #{xl_positional_encoding_fwd.1} parent=46 // loop_header_branch
                  %242 = sbr.rel (%p239) target = $region61
                $region58: #{xl_positional_encoding_fwd.1} parent=46 // loop_body
                  %v246 = vld [vmem:[%s244] sm:$0xff]
                  %247 = vst [vmem:[%s245] sm:$0xff] %v246
                  %v248 = vld [vmem:[%s244 + $0x278] sm:$0xff]
                  %249 = vst [vmem:[%s245 + $0x140] sm:$0xff] %v248
                  %s250 = sadd.s32 1, %s243
                  %p251 = scmp.ge.s32.totalorder %s250, %s231
                  %s252 = scalar_select %p251, 0, %s250
                  %s253 = smul.u32 %s252, 8
                  %s254 = smul.u32 %s252, 8
                  %s255 = scalar_lea.vmem %s234, %s253
                  %s256 = scalar_lea.vmem %s236, %s254 [#allocation2]
                $region59: #{xl_positional_encoding_fwd.1} parent=46 // loop_footer
                  %s240 = sadd.s32 %s238, 1
                $region60: #{xl_positional_encoding_fwd.1} parent=46 // loop_footer_branch
                  %237 = sbr.rel target = $region56
                $region61: #{xl_positional_encoding_fwd.1} parent=46 // loop_exit
                  _
              $region47: #{xl_positional_encoding_fwd.1} parent=31 // pred_fallthru
                _
              %p257 = pneg %p144
              // Predicated region
              $region62: #{xl_positional_encoding_fwd.1} parent=31 // pred_check
                _
              $region63: #{xl_positional_encoding_fwd.1} parent=31 // pred_check_branch
                %259 = sbr.rel (%p144) target = $region65
              $region64: #{xl_positional_encoding_fwd.1} parent=31 // pred_region
                %s260 = sand.u32 %s118, 7
                %s261 = ssub.s32 %s118, %s260
                %s262 = scalar_lea.vmem %s117, %s261
                %s263 = ssub.s32 %s118, %s260
                %s264 = scalar_lea.vmem %s109, %s263 [#allocation2]
                %s265 = sshrl.u32 %s118, 3
                %s266 = sshrl.u32 %s265, 4
                // While loop
                $region66: #{xl_positional_encoding_fwd.1} parent=64 // loop_pre_header
                  _
                $region67: #{xl_positional_encoding_fwd.1} parent=64 // loop_header
                  %s268 = sphi 0, %s270
                  %p269 = scmp.ge.s32.totalorder %s268, %s266
                  %s273 = sphi 0, %s342
                  %s274 = sphi %s117, %s345
                  %s275 = sphi %s109, %s346
                $region68: #{xl_positional_encoding_fwd.1} parent=64 // loop_header_branch
                  %272 = sbr.rel (%p269) target = $region72
                $region69: #{xl_positional_encoding_fwd.1} parent=64 // loop_body
                  %v276 = vld [vmem:[%s274] sm:$0xff]
                  %277 = vst [vmem:[%s275] sm:$0xff] %v276
                  %v278 = vld [vmem:[%s274 + $0x8] sm:$0xff]
                  %279 = vst [vmem:[%s275 + $0x8] sm:$0xff] %v278
                  %v280 = vld [vmem:[%s274 + $0x10] sm:$0xff]
                  %281 = vst [vmem:[%s275 + $0x10] sm:$0xff] %v280
                  %v282 = vld [vmem:[%s274 + $0x18] sm:$0xff]
                  %283 = vst [vmem:[%s275 + $0x18] sm:$0xff] %v282
                  %v284 = vld [vmem:[%s274 + $0x20] sm:$0xff]
                  %285 = vst [vmem:[%s275 + $0x20] sm:$0xff] %v284
                  %v286 = vld [vmem:[%s274 + $0x28] sm:$0xff]
                  %287 = vst [vmem:[%s275 + $0x28] sm:$0xff] %v286
                  %v288 = vld [vmem:[%s274 + $0x30] sm:$0xff]
                  %289 = vst [vmem:[%s275 + $0x30] sm:$0xff] %v288
                  %v290 = vld [vmem:[%s274 + $0x38] sm:$0xff]
                  %291 = vst [vmem:[%s275 + $0x38] sm:$0xff] %v290
                  %v292 = vld [vmem:[%s274 + $0x40] sm:$0xff]
                  %293 = vst [vmem:[%s275 + $0x40] sm:$0xff] %v292
                  %v294 = vld [vmem:[%s274 + $0x48] sm:$0xff]
                  %295 = vst [vmem:[%s275 + $0x48] sm:$0xff] %v294
                  %v296 = vld [vmem:[%s274 + $0x50] sm:$0xff]
                  %297 = vst [vmem:[%s275 + $0x50] sm:$0xff] %v296
                  %v298 = vld [vmem:[%s274 + $0x58] sm:$0xff]
                  %299 = vst [vmem:[%s275 + $0x58] sm:$0xff] %v298
                  %v300 = vld [vmem:[%s274 + $0x60] sm:$0xff]
                  %301 = vst [vmem:[%s275 + $0x60] sm:$0xff] %v300
                  %v302 = vld [vmem:[%s274 + $0x68] sm:$0xff]
                  %303 = vst [vmem:[%s275 + $0x68] sm:$0xff] %v302
                  %v304 = vld [vmem:[%s274 + $0x70] sm:$0xff]
                  %305 = vst [vmem:[%s275 + $0x70] sm:$0xff] %v304
                  %v306 = vld [vmem:[%s274 + $0x78] sm:$0xff]
                  %307 = vst [vmem:[%s275 + $0x78] sm:$0xff] %v306
                  %v308 = vld [vmem:[%s274 + $0x278] sm:$0xff]
                  %309 = vst [vmem:[%s275 + $0x140] sm:$0xff] %v308
                  %v310 = vld [vmem:[%s274 + $0x280] sm:$0xff]
                  %311 = vst [vmem:[%s275 + $0x148] sm:$0xff] %v310
                  %v312 = vld [vmem:[%s274 + $0x288] sm:$0xff]
                  %313 = vst [vmem:[%s275 + $0x150] sm:$0xff] %v312
                  %v314 = vld [vmem:[%s274 + $0x290] sm:$0xff]
                  %315 = vst [vmem:[%s275 + $0x158] sm:$0xff] %v314
                  %v316 = vld [vmem:[%s274 + $0x298] sm:$0xff]
                  %317 = vst [vmem:[%s275 + $0x160] sm:$0xff] %v316
                  %v318 = vld [vmem:[%s274 + $0x2a0] sm:$0xff]
                  %319 = vst [vmem:[%s275 + $0x168] sm:$0xff] %v318
                  %v320 = vld [vmem:[%s274 + $0x2a8] sm:$0xff]
                  %321 = vst [vmem:[%s275 + $0x170] sm:$0xff] %v320
                  %v322 = vld [vmem:[%s274 + $0x2b0] sm:$0xff]
                  %323 = vst [vmem:[%s275 + $0x178] sm:$0xff] %v322
                  %v324 = vld [vmem:[%s274 + $0x2b8] sm:$0xff]
                  %325 = vst [vmem:[%s275 + $0x180] sm:$0xff] %v324
                  %v326 = vld [vmem:[%s274 + $0x2c0] sm:$0xff]
                  %327 = vst [vmem:[%s275 + $0x188] sm:$0xff] %v326
                  %v328 = vld [vmem:[%s274 + $0x2c8] sm:$0xff]
                  %329 = vst [vmem:[%s275 + $0x190] sm:$0xff] %v328
                  %v330 = vld [vmem:[%s274 + $0x2d0] sm:$0xff]
                  %331 = vst [vmem:[%s275 + $0x198] sm:$0xff] %v330
                  %v332 = vld [vmem:[%s274 + $0x2d8] sm:$0xff]
                  %333 = vst [vmem:[%s275 + $0x1a0] sm:$0xff] %v332
                  %v334 = vld [vmem:[%s274 + $0x2e0] sm:$0xff]
                  %335 = vst [vmem:[%s275 + $0x1a8] sm:$0xff] %v334
                  %v336 = vld [vmem:[%s274 + $0x2e8] sm:$0xff]
                  %337 = vst [vmem:[%s275 + $0x1b0] sm:$0xff] %v336
                  %v338 = vld [vmem:[%s274 + $0x2f0] sm:$0xff]
                  %339 = vst [vmem:[%s275 + $0x1b8] sm:$0xff] %v338
                  %s340 = sadd.s32 1, %s273
                  %p341 = scmp.ge.s32.totalorder %s340, %s266
                  %s342 = scalar_select %p341, 0, %s340
                  %s343 = smul.u32 %s342, 128
                  %s344 = smul.u32 %s342, 128
                  %s345 = scalar_lea.vmem %s117, %s343
                  %s346 = scalar_lea.vmem %s109, %s344 [#allocation2]
                $region70: #{xl_positional_encoding_fwd.1} parent=64 // loop_footer
                  %s270 = sadd.s32 %s268, 1
                $region71: #{xl_positional_encoding_fwd.1} parent=64 // loop_footer_branch
                  %267 = sbr.rel target = $region67
                $region72: #{xl_positional_encoding_fwd.1} parent=64 // loop_exit
                  _
                %s347 = sshrl.u32 %s265, 4
                %s348 = sand.u32 %s265, 15
                %s349 = smul.u32 %s347, 16
                %s350 = smul.u32 8, %s349
                %s351 = scalar_lea.vmem %s117, %s350
                %s352 = smul.u32 8, %s349
                %s353 = scalar_lea.vmem %s109, %s352 [#allocation2]
                // While loop
                $region73: #{xl_positional_encoding_fwd.1} parent=64 // loop_pre_header
                  _
                $region74: #{xl_positional_encoding_fwd.1} parent=64 // loop_header
                  %s355 = sphi 0, %s357
                  %p356 = scmp.ge.s32.totalorder %s355, %s348
                  %s360 = sphi 0, %s369
                  %s361 = sphi %s351, %s372
                  %s362 = sphi %s353, %s373
                $region75: #{xl_positional_encoding_fwd.1} parent=64 // loop_header_branch
                  %359 = sbr.rel (%p356) target = $region79
                $region76: #{xl_positional_encoding_fwd.1} parent=64 // loop_body
                  %v363 = vld [vmem:[%s361] sm:$0xff]
                  %364 = vst [vmem:[%s362] sm:$0xff] %v363
                  %v365 = vld [vmem:[%s361 + $0x278] sm:$0xff]
                  %366 = vst [vmem:[%s362 + $0x140] sm:$0xff] %v365
                  %s367 = sadd.s32 1, %s360
                  %p368 = scmp.ge.s32.totalorder %s367, %s348
                  %s369 = scalar_select %p368, 0, %s367
                  %s370 = smul.u32 %s369, 8
                  %s371 = smul.u32 %s369, 8
                  %s372 = scalar_lea.vmem %s351, %s370
                  %s373 = scalar_lea.vmem %s353, %s371 [#allocation2]
                $region77: #{xl_positional_encoding_fwd.1} parent=64 // loop_footer
                  %s357 = sadd.s32 %s355, 1
                $region78: #{xl_positional_encoding_fwd.1} parent=64 // loop_footer_branch
                  %354 = sbr.rel target = $region74
                $region79: #{xl_positional_encoding_fwd.1} parent=64 // loop_exit
                  _
                %s374 = sshll.u32 1, %s260
                %s375 = ssub.s32 %s374, 1
                loop: start=0, step=1, limit=1
                $region80: #{xl_positional_encoding_fwd.1} parent=64 // loop_pre_header
                  _
                $region81: #{xl_positional_encoding_fwd.1} parent=64 // loop_header
                  %s377 = sphi 0, %s381
                  %p378 = scmp.ge.s32.totalorder %s377, 1
                  %s382 = sphi %s262, %s262
                  %s383 = sphi %s264, %s264
                $region82: #{xl_positional_encoding_fwd.1} parent=64 // loop_header_branch
                  %380 = sbr.rel (%p378) target = $region86
                $region83: #{xl_positional_encoding_fwd.1} parent=64 // loop_body
                  %v384 = vld [vmem:[%s382] sm:%s375]
                  %385 = vst [vmem:[%s383] sm:%s375] %v384
                  %v386 = vld [vmem:[%s382 + $0x278] sm:%s375]
                  %387 = vst [vmem:[%s383 + $0x140] sm:%s375] %v386
                $region84: #{xl_positional_encoding_fwd.1} parent=64 // loop_footer
                  %s381 = sadd.s32 1, %s377
                $region85: #{xl_positional_encoding_fwd.1} parent=64 // loop_footer_branch
                  %376 = sbr.rel target = $region81
                $region86: #{xl_positional_encoding_fwd.1} parent=64 // loop_exit
                  _
              $region65: #{xl_positional_encoding_fwd.1} parent=31 // pred_fallthru
                _
            $region32: #{xl_positional_encoding_fwd.1} parent=27 // pred_fallthru
              _
            // Predicated region
            $region33: #{xl_positional_encoding_fwd.1} parent=27 // pred_check
              %p126 = pneg %p122
            $region34: #{xl_positional_encoding_fwd.1} parent=27 // pred_check_branch
              %128 = sbr.rel (%p126) target = $region36
            $region35: #{xl_positional_encoding_fwd.1} parent=27 // pred_region
              %s129 = sshll.u32 1, %s118
              %s130 = ssub.s32 %s129, 1
              loop: start=0, step=1, limit=1
              $region37: #{xl_positional_encoding_fwd.1} parent=35 // loop_pre_header
                _
              $region38: #{xl_positional_encoding_fwd.1} parent=35 // loop_header
                %s132 = sphi 0, %s136
                %p133 = scmp.ge.s32.totalorder %s132, 1
                %s137 = sphi %s117, %s117
                %s138 = sphi %s109, %s109
              $region39: #{xl_positional_encoding_fwd.1} parent=35 // loop_header_branch
                %135 = sbr.rel (%p133) target = $region43
              $region40: #{xl_positional_encoding_fwd.1} parent=35 // loop_body
                %v139 = vld [vmem:[%s137] sm:%s130]
                %140 = vst [vmem:[%s138] sm:%s130] %v139
                %v141 = vld [vmem:[%s137 + $0x278] sm:%s130]
                %142 = vst [vmem:[%s138 + $0x140] sm:%s130] %v141
              $region41: #{xl_positional_encoding_fwd.1} parent=35 // loop_footer
                %s136 = sadd.s32 1, %s132
              $region42: #{xl_positional_encoding_fwd.1} parent=35 // loop_footer_branch
                %131 = sbr.rel target = $region38
              $region43: #{xl_positional_encoding_fwd.1} parent=35 // loop_exit
                _
            $region36: #{xl_positional_encoding_fwd.1} parent=27 // pred_fallthru
              _
          $region28: #{xl_positional_encoding_fwd.1} parent=23 // pred_fallthru
            _
          %388 = vnop
        $region24: #{xl_positional_encoding_fwd.1} parent=19 // pred_fallthru
          _
      $region20: #{xl_positional_encoding_fwd.1} parent=5 // pred_fallthru
        _
      %p389 = scmp.le.s32.totalorder 1, %s8
      %p390 = scmp.lt.s32.totalorder %s8, 3
      %p391 = pnand %p389, %p390
      %p392 = pneg %p391
      // Predicated region
      $region87: #{xl_positional_encoding_fwd.1} parent=5 // pred_check
        _
      $region88: #{xl_positional_encoding_fwd.1} parent=5 // pred_check_branch
        %394 = sbr.rel (%p391) target = $region90
      $region89: #{xl_positional_encoding_fwd.1} parent=5 // pred_region
        %s395 = ssub.s32 %s8, 1
        %s396 = sand.u32 %s42, 1
        %s397 = sand.u32 %s42, 1
        %s398 = smul.addr %s397, 640
        %s399 = scalar_lea.vmem [#allocation2], %s398
        // Predicated region
        $region91: #{xl_positional_encoding_fwd.1} parent=89 // pred_check
          %p400 = pneg %p55
        $region92: #{xl_positional_encoding_fwd.1} parent=89 // pred_check_branch
          %402 = sbr.rel (%p400) target = $region94
        $region93: #{xl_positional_encoding_fwd.1} parent=89 // pred_region
          _
        $region94: #{xl_positional_encoding_fwd.1} parent=89 // pred_fallthru
          _
        %p403 = pneg %p29
        %p404 = pneg %p26
        %s405 = sand.u32 %s42, 1
        %s406 = sand.u32 %s42, 1
        %s407 = smul.addr %s406, 640
        %s408 = scalar_lea.vmem [#allocation2], %s407
        %p409 = pneg %p55
        %p410 = pneg %p52
        %p411 = pneg %p81
        %p412 = pneg %p78
        %s413 = sand.u32 %s68, 1
        %s414 = sand.u32 %s68, 1
        %s415 = smul.addr %s414, 1280
        %s416 = scalar_lea.vmem [#allocation3], %s415
        %s417 = smul.u32 40, %s13
        %s418 = ssub.s32 79, %s417
        %p419 = scmp.lt.s32.totalorder %s418, 40
        %s420 = scalar_select %p419, %s418, 40
        %s421 = smul.u32 16, %s420
        %s422 = smul.u32 40, %s13
        %s423 = ssub.s32 79, %s422
        %p424 = scmp.lt.s32.totalorder %s423, 40
        %s425 = scalar_select %p424, %s423, 40
        %s426 = smul.u32 32, %s425
        %v427 = vld [vmem:[%s0] sm:$0xff]
        %v428 = vld [vmem:[%s0 + $0x8] sm:$0xff]
        %v429 = vld [vmem:[%s0 + $0x10] sm:$0xff]
        %v430 = vld [vmem:[%s0 + $0x18] sm:$0xff]
        %v431 = vld [vmem:[%s399] sm:$0xff]
        %v432 = vld [vmem:[%s399 + $0x8] sm:$0xff]
        %v433 = vld [vmem:[%s399 + $0x10] sm:$0xff]
        %v434 = vld [vmem:[%s399 + $0x18] sm:$0xff]
        %v435 = vld [vmem:[%s399 + $0x20] sm:$0xff]
        %v436 = vld [vmem:[%s399 + $0x28] sm:$0xff]
        %v437 = vld [vmem:[%s399 + $0x30] sm:$0xff]
        %v438 = vld [vmem:[%s399 + $0x38] sm:$0xff]
        %v439 = vld [vmem:[%s399 + $0x40] sm:$0xff]
        %v440 = vld [vmem:[%s399 + $0x48] sm:$0xff]
        %v441 = vld [vmem:[%s399 + $0x50] sm:$0xff]
        %v442 = vld [vmem:[%s399 + $0x58] sm:$0xff]
        %v443 = vld [vmem:[%s399 + $0x60] sm:$0xff]
        %v444 = vld [vmem:[%s399 + $0x68] sm:$0xff]
        %v445 = vld [vmem:[%s399 + $0x70] sm:$0xff]
        %v446 = vld [vmem:[%s399 + $0x78] sm:$0xff]
        %v447 = vld [vmem:[%s399 + $0x80] sm:$0xff]
        %v448 = vld [vmem:[%s399 + $0x88] sm:$0xff]
        %v449 = vld [vmem:[%s399 + $0x90] sm:$0xff]
        %v450 = vld [vmem:[%s399 + $0x98] sm:$0xff]
        %v451 = vld [vmem:[%s399 + $0xa0] sm:$0xff]
        %v452 = vld [vmem:[%s399 + $0xa8] sm:$0xff]
        %v453 = vld [vmem:[%s399 + $0xb0] sm:$0xff]
        %v454 = vld [vmem:[%s399 + $0xb8] sm:$0xff]
        %v455 = vld [vmem:[%s399 + $0xc0] sm:$0xff]
        %v456 = vld [vmem:[%s399 + $0xc8] sm:$0xff]
        %v457 = vld [vmem:[%s399 + $0xd0] sm:$0xff]
        %v458 = vld [vmem:[%s399 + $0xd8] sm:$0xff]
        %v459 = vld [vmem:[%s399 + $0xe0] sm:$0xff]
        %v460 = vld [vmem:[%s399 + $0xe8] sm:$0xff]
        %v461 = vld [vmem:[%s399 + $0xf0] sm:$0xff]
        %v462 = vld [vmem:[%s399 + $0xf8] sm:$0xff]
        %v463 = vld [vmem:[%s399 + $0x100] sm:$0xff]
        %v464 = vld [vmem:[%s399 + $0x108] sm:$0xff]
        %v465 = vld [vmem:[%s399 + $0x110] sm:$0xff]
        %v466 = vld [vmem:[%s399 + $0x118] sm:$0xff]
        %v467 = vld [vmem:[%s399 + $0x120] sm:$0xff]
        %v468 = vld [vmem:[%s399 + $0x128] sm:$0xff]
        %v469 = vld [vmem:[%s399 + $0x130] sm:$0xff]
        %v470 = vld [vmem:[%s399 + $0x138] sm:$0xff]
        %v471 = vld [vmem:[%s399 + $0x140] sm:$0xff]
        %v472 = vld [vmem:[%s399 + $0x148] sm:$0xff]
        %v473 = vld [vmem:[%s399 + $0x150] sm:$0xff]
        %v474 = vld [vmem:[%s399 + $0x158] sm:$0xff]
        %v475 = vld [vmem:[%s399 + $0x160] sm:$0xff]
        %v476 = vld [vmem:[%s399 + $0x168] sm:$0xff]
        %v477 = vld [vmem:[%s399 + $0x170] sm:$0xff]
        %v478 = vld [vmem:[%s399 + $0x178] sm:$0xff]
        %v479 = vld [vmem:[%s399 + $0x180] sm:$0xff]
        %v480 = vld [vmem:[%s399 + $0x188] sm:$0xff]
        %v481 = vld [vmem:[%s399 + $0x190] sm:$0xff]
        %v482 = vld [vmem:[%s399 + $0x198] sm:$0xff]
        %v483 = vld [vmem:[%s399 + $0x1a0] sm:$0xff]
        %v484 = vld [vmem:[%s399 + $0x1a8] sm:$0xff]
        %v485 = vld [vmem:[%s399 + $0x1b0] sm:$0xff]
        %v486 = vld [vmem:[%s399 + $0x1b8] sm:$0xff]
        %v487 = vld [vmem:[%s399 + $0x1c0] sm:$0xff]
        %v488 = vld [vmem:[%s399 + $0x1c8] sm:$0xff]
        %v489 = vld [vmem:[%s399 + $0x1d0] sm:$0xff]
        %v490 = vld [vmem:[%s399 + $0x1d8] sm:$0xff]
        %v491 = vld [vmem:[%s399 + $0x1e0] sm:$0xff]
        %v492 = vld [vmem:[%s399 + $0x1e8] sm:$0xff]
        %v493 = vld [vmem:[%s399 + $0x1f0] sm:$0xff]
        %v494 = vld [vmem:[%s399 + $0x1f8] sm:$0xff]
        %v495 = vld [vmem:[%s399 + $0x200] sm:$0xff]
        %v496 = vld [vmem:[%s399 + $0x208] sm:$0xff]
        %v497 = vld [vmem:[%s399 + $0x210] sm:$0xff]
        %v498 = vld [vmem:[%s399 + $0x218] sm:$0xff]
        %v499 = vld [vmem:[%s399 + $0x220] sm:$0xff]
        %v500 = vld [vmem:[%s399 + $0x228] sm:$0xff]
        %v501 = vld [vmem:[%s399 + $0x230] sm:$0xff]
        %v502 = vld [vmem:[%s399 + $0x238] sm:$0xff]
        %v503 = vld [vmem:[%s399 + $0x240] sm:$0xff]
        %v504 = vld [vmem:[%s399 + $0x248] sm:$0xff]
        %v505 = vld [vmem:[%s399 + $0x250] sm:$0xff]
        %v506 = vld [vmem:[%s399 + $0x258] sm:$0xff]
        %v507 = vld [vmem:[%s399 + $0x260] sm:$0xff]
        %v508 = vld [vmem:[%s399 + $0x268] sm:$0xff]
        %v509 = vld [vmem:[%s399 + $0x270] sm:$0xff]
        %v510 = vld [vmem:[%s399 + $0x278] sm:$0xff]
        %vm511 = vcmask 130048
        %v513 = vsel %vm511, %v427, 0
        %v516 = vsel %vm511, %v428, 0
        %v519 = vsel %vm511, %v429, 0
        %v522 = vsel %vm511, %v430, 0
        %524 = vmatpush.msra.mxu0 0.0
        %525 = vmatpush.msra.mxu0 0.0
        %526 = vmatpush.msra.mxu0 0.0
        %527 = vmatpush.msra.mxu0 0.0
        %528 = vmatpush.msra.mxu0 0.0
        %529 = vmatpush.msra.mxu0 0.0
        %530 = vmatpush.msra.mxu0 0.0
        %531 = vmatpush.msra.mxu0 0.0
        %532 = vmatpush.msra.mxu0 0.0
        %533 = vmatpush.msra.mxu0 0.0
        %534 = vmatpush.msra.mxu0 0.0
        %535 = vmatpush.msra.mxu0 0.0
        %536 = vmatpush.msra.mxu0 0.0
        %537 = vmatpush.msra.mxu0 0.0
        %538 = vmatpush.msra.mxu0 %v471
        %539 = vmatpush.msra.mxu0 %v431
        %540 = vmatmul.f32.gmra.mxu0 %v513
        %v541 = vpop.f32.mrf.mxu0
        %v542 = vadd.f32 0.0, %v541
        %543 = vmatmul.f32.gmra.mxu0 %v516
        %v544 = vpop.f32.mrf.mxu0
        %v545 = vadd.f32 0.0, %v544
        %546 = vmatmul.f32.gmra.mxu0 %v519
        %v547 = vpop.f32.mrf.mxu0
        %v548 = vadd.f32 0.0, %v547
        %549 = vmatmul.f32.gmra.mxu0 %v522
        %v550 = vpop.f32.mrf.mxu0
        %v551 = vadd.f32 0.0, %v550
        %552 = vdwg.mxu0
        %553 = vmatpush.msra.mxu0 0.0
        %554 = vmatpush.msra.mxu0 0.0
        %555 = vmatpush.msra.mxu0 0.0
        %556 = vmatpush.msra.mxu0 0.0
        %557 = vmatpush.msra.mxu0 0.0
        %558 = vmatpush.msra.mxu0 0.0
        %559 = vmatpush.msra.mxu0 0.0
        %560 = vmatpush.msra.mxu0 0.0
        %561 = vmatpush.msra.mxu0 0.0
        %562 = vmatpush.msra.mxu0 0.0
        %563 = vmatpush.msra.mxu0 0.0
        %564 = vmatpush.msra.mxu0 0.0
        %565 = vmatpush.msra.mxu0 0.0
        %566 = vmatpush.msra.mxu0 0.0
        %567 = vmatpush.msra.mxu0 %v472
        %568 = vmatpush.msra.mxu0 %v432
        %569 = vmatmul.f32.gmra.mxu0 %v513
        %v570 = vpop.f32.mrf.mxu0
        %v571 = vadd.f32 0.0, %v570
        %572 = vmatmul.f32.gmra.mxu0 %v516
        %v573 = vpop.f32.mrf.mxu0
        %v574 = vadd.f32 0.0, %v573
        %575 = vmatmul.f32.gmra.mxu0 %v519
        %v576 = vpop.f32.mrf.mxu0
        %v577 = vadd.f32 0.0, %v576
        %578 = vmatmul.f32.gmra.mxu0 %v522
        %v579 = vpop.f32.mrf.mxu0
        %v580 = vadd.f32 0.0, %v579
        %581 = vdwg.mxu0
        %582 = vmatpush.msra.mxu0 0.0
        %583 = vmatpush.msra.mxu0 0.0
        %584 = vmatpush.msra.mxu0 0.0
        %585 = vmatpush.msra.mxu0 0.0
        %586 = vmatpush.msra.mxu0 0.0
        %587 = vmatpush.msra.mxu0 0.0
        %588 = vmatpush.msra.mxu0 0.0
        %589 = vmatpush.msra.mxu0 0.0
        %590 = vmatpush.msra.mxu0 0.0
        %591 = vmatpush.msra.mxu0 0.0
        %592 = vmatpush.msra.mxu0 0.0
        %593 = vmatpush.msra.mxu0 0.0
        %594 = vmatpush.msra.mxu0 0.0
        %595 = vmatpush.msra.mxu0 0.0
        %596 = vmatpush.msra.mxu0 %v473
        %597 = vmatpush.msra.mxu0 %v433
        %598 = vmatmul.f32.gmra.mxu0 %v513
        %v599 = vpop.f32.mrf.mxu0
        %v600 = vadd.f32 0.0, %v599
        %601 = vmatmul.f32.gmra.mxu0 %v516
        %v602 = vpop.f32.mrf.mxu0
        %v603 = vadd.f32 0.0, %v602
        %604 = vmatmul.f32.gmra.mxu0 %v519
        %v605 = vpop.f32.mrf.mxu0
        %v606 = vadd.f32 0.0, %v605
        %607 = vmatmul.f32.gmra.mxu0 %v522
        %v608 = vpop.f32.mrf.mxu0
        %v609 = vadd.f32 0.0, %v608
        %610 = vdwg.mxu0
        %611 = vmatpush.msra.mxu0 0.0
        %612 = vmatpush.msra.mxu0 0.0
        %613 = vmatpush.msra.mxu0 0.0
        %614 = vmatpush.msra.mxu0 0.0
        %615 = vmatpush.msra.mxu0 0.0
        %616 = vmatpush.msra.mxu0 0.0
        %617 = vmatpush.msra.mxu0 0.0
        %618 = vmatpush.msra.mxu0 0.0
        %619 = vmatpush.msra.mxu0 0.0
        %620 = vmatpush.msra.mxu0 0.0
        %621 = vmatpush.msra.mxu0 0.0
        %622 = vmatpush.msra.mxu0 0.0
        %623 = vmatpush.msra.mxu0 0.0
        %624 = vmatpush.msra.mxu0 0.0
        %625 = vmatpush.msra.mxu0 %v474
        %626 = vmatpush.msra.mxu0 %v434
        %627 = vmatmul.f32.gmra.mxu0 %v513
        %v628 = vpop.f32.mrf.mxu0
        %v629 = vadd.f32 0.0, %v628
        %630 = vmatmul.f32.gmra.mxu0 %v516
        %v631 = vpop.f32.mrf.mxu0
        %v632 = vadd.f32 0.0, %v631
        %633 = vmatmul.f32.gmra.mxu0 %v519
        %v634 = vpop.f32.mrf.mxu0
        %v635 = vadd.f32 0.0, %v634
        %636 = vmatmul.f32.gmra.mxu0 %v522
        %v637 = vpop.f32.mrf.mxu0
        %v638 = vadd.f32 0.0, %v637
        %639 = vdwg.mxu0
        %640 = vmatpush.msra.mxu0 0.0
        %641 = vmatpush.msra.mxu0 0.0
        %642 = vmatpush.msra.mxu0 0.0
        %643 = vmatpush.msra.mxu0 0.0
        %644 = vmatpush.msra.mxu0 0.0
        %645 = vmatpush.msra.mxu0 0.0
        %646 = vmatpush.msra.mxu0 0.0
        %647 = vmatpush.msra.mxu0 0.0
        %648 = vmatpush.msra.mxu0 0.0
        %649 = vmatpush.msra.mxu0 0.0
        %650 = vmatpush.msra.mxu0 0.0
        %651 = vmatpush.msra.mxu0 0.0
        %652 = vmatpush.msra.mxu0 0.0
        %653 = vmatpush.msra.mxu0 0.0
        %654 = vmatpush.msra.mxu0 %v475
        %655 = vmatpush.msra.mxu0 %v435
        %656 = vmatmul.f32.gmra.mxu0 %v513
        %v657 = vpop.f32.mrf.mxu0
        %v658 = vadd.f32 0.0, %v657
        %659 = vmatmul.f32.gmra.mxu0 %v516
        %v660 = vpop.f32.mrf.mxu0
        %v661 = vadd.f32 0.0, %v660
        %662 = vmatmul.f32.gmra.mxu0 %v519
        %v663 = vpop.f32.mrf.mxu0
        %v664 = vadd.f32 0.0, %v663
        %665 = vmatmul.f32.gmra.mxu0 %v522
        %v666 = vpop.f32.mrf.mxu0
        %v667 = vadd.f32 0.0, %v666
        %668 = vdwg.mxu0
        %669 = vmatpush.msra.mxu0 0.0
        %670 = vmatpush.msra.mxu0 0.0
        %671 = vmatpush.msra.mxu0 0.0
        %672 = vmatpush.msra.mxu0 0.0
        %673 = vmatpush.msra.mxu0 0.0
        %674 = vmatpush.msra.mxu0 0.0
        %675 = vmatpush.msra.mxu0 0.0
        %676 = vmatpush.msra.mxu0 0.0
        %677 = vmatpush.msra.mxu0 0.0
        %678 = vmatpush.msra.mxu0 0.0
        %679 = vmatpush.msra.mxu0 0.0
        %680 = vmatpush.msra.mxu0 0.0
        %681 = vmatpush.msra.mxu0 0.0
        %682 = vmatpush.msra.mxu0 0.0
        %683 = vmatpush.msra.mxu0 %v476
        %684 = vmatpush.msra.mxu0 %v436
        %685 = vmatmul.f32.gmra.mxu0 %v513
        %v686 = vpop.f32.mrf.mxu0
        %v687 = vadd.f32 0.0, %v686
        %688 = vmatmul.f32.gmra.mxu0 %v516
        %v689 = vpop.f32.mrf.mxu0
        %v690 = vadd.f32 0.0, %v689
        %691 = vmatmul.f32.gmra.mxu0 %v519
        %v692 = vpop.f32.mrf.mxu0
        %v693 = vadd.f32 0.0, %v692
        %694 = vmatmul.f32.gmra.mxu0 %v522
        %v695 = vpop.f32.mrf.mxu0
        %v696 = vadd.f32 0.0, %v695
        %697 = vdwg.mxu0
        %698 = vmatpush.msra.mxu0 0.0
        %699 = vmatpush.msra.mxu0 0.0
        %700 = vmatpush.msra.mxu0 0.0
        %701 = vmatpush.msra.mxu0 0.0
        %702 = vmatpush.msra.mxu0 0.0
        %703 = vmatpush.msra.mxu0 0.0
        %704 = vmatpush.msra.mxu0 0.0
        %705 = vmatpush.msra.mxu0 0.0
        %706 = vmatpush.msra.mxu0 0.0
        %707 = vmatpush.msra.mxu0 0.0
        %708 = vmatpush.msra.mxu0 0.0
        %709 = vmatpush.msra.mxu0 0.0
        %710 = vmatpush.msra.mxu0 0.0
        %711 = vmatpush.msra.mxu0 0.0
        %712 = vmatpush.msra.mxu0 %v477
        %713 = vmatpush.msra.mxu0 %v437
        %714 = vmatmul.f32.gmra.mxu0 %v513
        %v715 = vpop.f32.mrf.mxu0
        %v716 = vadd.f32 0.0, %v715
        %717 = vmatmul.f32.gmra.mxu0 %v516
        %v718 = vpop.f32.mrf.mxu0
        %v719 = vadd.f32 0.0, %v718
        %720 = vmatmul.f32.gmra.mxu0 %v519
        %v721 = vpop.f32.mrf.mxu0
        %v722 = vadd.f32 0.0, %v721
        %723 = vmatmul.f32.gmra.mxu0 %v522
        %v724 = vpop.f32.mrf.mxu0
        %v725 = vadd.f32 0.0, %v724
        %726 = vdwg.mxu0
        %727 = vmatpush.msra.mxu0 0.0
        %728 = vmatpush.msra.mxu0 0.0
        %729 = vmatpush.msra.mxu0 0.0
        %730 = vmatpush.msra.mxu0 0.0
        %731 = vmatpush.msra.mxu0 0.0
        %732 = vmatpush.msra.mxu0 0.0
        %733 = vmatpush.msra.mxu0 0.0
        %734 = vmatpush.msra.mxu0 0.0
        %735 = vmatpush.msra.mxu0 0.0
        %736 = vmatpush.msra.mxu0 0.0
        %737 = vmatpush.msra.mxu0 0.0
        %738 = vmatpush.msra.mxu0 0.0
        %739 = vmatpush.msra.mxu0 0.0
        %740 = vmatpush.msra.mxu0 0.0
        %741 = vmatpush.msra.mxu0 %v478
        %742 = vmatpush.msra.mxu0 %v438
        %743 = vmatmul.f32.gmra.mxu0 %v513
        %v744 = vpop.f32.mrf.mxu0
        %v745 = vadd.f32 0.0, %v744
        %746 = vmatmul.f32.gmra.mxu0 %v516
        %v747 = vpop.f32.mrf.mxu0
        %v748 = vadd.f32 0.0, %v747
        %749 = vmatmul.f32.gmra.mxu0 %v519
        %v750 = vpop.f32.mrf.mxu0
        %v751 = vadd.f32 0.0, %v750
        %752 = vmatmul.f32.gmra.mxu0 %v522
        %v753 = vpop.f32.mrf.mxu0
        %v754 = vadd.f32 0.0, %v753
        %755 = vdwg.mxu0
        %756 = vmatpush.msra.mxu0 0.0
        %757 = vmatpush.msra.mxu0 0.0
        %758 = vmatpush.msra.mxu0 0.0
        %759 = vmatpush.msra.mxu0 0.0
        %760 = vmatpush.msra.mxu0 0.0
        %761 = vmatpush.msra.mxu0 0.0
        %762 = vmatpush.msra.mxu0 0.0
        %763 = vmatpush.msra.mxu0 0.0
        %764 = vmatpush.msra.mxu0 0.0
        %765 = vmatpush.msra.mxu0 0.0
        %766 = vmatpush.msra.mxu0 0.0
        %767 = vmatpush.msra.mxu0 0.0
        %768 = vmatpush.msra.mxu0 0.0
        %769 = vmatpush.msra.mxu0 0.0
        %770 = vmatpush.msra.mxu0 %v479
        %771 = vmatpush.msra.mxu0 %v439
        %772 = vmatmul.f32.gmra.mxu0 %v513
        %v773 = vpop.f32.mrf.mxu0
        %v774 = vadd.f32 0.0, %v773
        %775 = vmatmul.f32.gmra.mxu0 %v516
        %v776 = vpop.f32.mrf.mxu0
        %v777 = vadd.f32 0.0, %v776
        %778 = vmatmul.f32.gmra.mxu0 %v519
        %v779 = vpop.f32.mrf.mxu0
        %v780 = vadd.f32 0.0, %v779
        %781 = vmatmul.f32.gmra.mxu0 %v522
        %v782 = vpop.f32.mrf.mxu0
        %v783 = vadd.f32 0.0, %v782
        %784 = vdwg.mxu0
        %785 = vmatpush.msra.mxu0 0.0
        %786 = vmatpush.msra.mxu0 0.0
        %787 = vmatpush.msra.mxu0 0.0
        %788 = vmatpush.msra.mxu0 0.0
        %789 = vmatpush.msra.mxu0 0.0
        %790 = vmatpush.msra.mxu0 0.0
        %791 = vmatpush.msra.mxu0 0.0
        %792 = vmatpush.msra.mxu0 0.0
        %793 = vmatpush.msra.mxu0 0.0
        %794 = vmatpush.msra.mxu0 0.0
        %795 = vmatpush.msra.mxu0 0.0
        %796 = vmatpush.msra.mxu0 0.0
        %797 = vmatpush.msra.mxu0 0.0
        %798 = vmatpush.msra.mxu0 0.0
        %799 = vmatpush.msra.mxu0 %v480
        %800 = vmatpush.msra.mxu0 %v440
        %801 = vmatmul.f32.gmra.mxu0 %v513
        %v802 = vpop.f32.mrf.mxu0
        %v803 = vadd.f32 0.0, %v802
        %804 = vmatmul.f32.gmra.mxu0 %v516
        %v805 = vpop.f32.mrf.mxu0
        %v806 = vadd.f32 0.0, %v805
        %807 = vmatmul.f32.gmra.mxu0 %v519
        %v808 = vpop.f32.mrf.mxu0
        %v809 = vadd.f32 0.0, %v808
        %810 = vmatmul.f32.gmra.mxu0 %v522
        %v811 = vpop.f32.mrf.mxu0
        %v812 = vadd.f32 0.0, %v811
        %813 = vdwg.mxu0
        %814 = vmatpush.msra.mxu0 0.0
        %815 = vmatpush.msra.mxu0 0.0
        %816 = vmatpush.msra.mxu0 0.0
        %817 = vmatpush.msra.mxu0 0.0
        %818 = vmatpush.msra.mxu0 0.0
        %819 = vmatpush.msra.mxu0 0.0
        %820 = vmatpush.msra.mxu0 0.0
        %821 = vmatpush.msra.mxu0 0.0
        %822 = vmatpush.msra.mxu0 0.0
        %823 = vmatpush.msra.mxu0 0.0
        %824 = vmatpush.msra.mxu0 0.0
        %825 = vmatpush.msra.mxu0 0.0
        %826 = vmatpush.msra.mxu0 0.0
        %827 = vmatpush.msra.mxu0 0.0
        %828 = vmatpush.msra.mxu0 %v481
        %829 = vmatpush.msra.mxu0 %v441
        %830 = vmatmul.f32.gmra.mxu0 %v513
        %v831 = vpop.f32.mrf.mxu0
        %v832 = vadd.f32 0.0, %v831
        %833 = vmatmul.f32.gmra.mxu0 %v516
        %v834 = vpop.f32.mrf.mxu0
        %v835 = vadd.f32 0.0, %v834
        %836 = vmatmul.f32.gmra.mxu0 %v519
        %v837 = vpop.f32.mrf.mxu0
        %v838 = vadd.f32 0.0, %v837
        %839 = vmatmul.f32.gmra.mxu0 %v522
        %v840 = vpop.f32.mrf.mxu0
        %v841 = vadd.f32 0.0, %v840
        %842 = vdwg.mxu0
        %843 = vmatpush.msra.mxu0 0.0
        %844 = vmatpush.msra.mxu0 0.0
        %845 = vmatpush.msra.mxu0 0.0
        %846 = vmatpush.msra.mxu0 0.0
        %847 = vmatpush.msra.mxu0 0.0
        %848 = vmatpush.msra.mxu0 0.0
        %849 = vmatpush.msra.mxu0 0.0
        %850 = vmatpush.msra.mxu0 0.0
        %851 = vmatpush.msra.mxu0 0.0
        %852 = vmatpush.msra.mxu0 0.0
        %853 = vmatpush.msra.mxu0 0.0
        %854 = vmatpush.msra.mxu0 0.0
        %855 = vmatpush.msra.mxu0 0.0
        %856 = vmatpush.msra.mxu0 0.0
        %857 = vmatpush.msra.mxu0 %v482
        %858 = vmatpush.msra.mxu0 %v442
        %859 = vmatmul.f32.gmra.mxu0 %v513
        %v860 = vpop.f32.mrf.mxu0
        %v861 = vadd.f32 0.0, %v860
        %862 = vmatmul.f32.gmra.mxu0 %v516
        %v863 = vpop.f32.mrf.mxu0
        %v864 = vadd.f32 0.0, %v863
        %865 = vmatmul.f32.gmra.mxu0 %v519
        %v866 = vpop.f32.mrf.mxu0
        %v867 = vadd.f32 0.0, %v866
        %868 = vmatmul.f32.gmra.mxu0 %v522
        %v869 = vpop.f32.mrf.mxu0
        %v870 = vadd.f32 0.0, %v869
        %871 = vdwg.mxu0
        %872 = vmatpush.msra.mxu0 0.0
        %873 = vmatpush.msra.mxu0 0.0
        %874 = vmatpush.msra.mxu0 0.0
        %875 = vmatpush.msra.mxu0 0.0
        %876 = vmatpush.msra.mxu0 0.0
        %877 = vmatpush.msra.mxu0 0.0
        %878 = vmatpush.msra.mxu0 0.0
        %879 = vmatpush.msra.mxu0 0.0
        %880 = vmatpush.msra.mxu0 0.0
        %881 = vmatpush.msra.mxu0 0.0
        %882 = vmatpush.msra.mxu0 0.0
        %883 = vmatpush.msra.mxu0 0.0
        %884 = vmatpush.msra.mxu0 0.0
        %885 = vmatpush.msra.mxu0 0.0
        %886 = vmatpush.msra.mxu0 %v483
        %887 = vmatpush.msra.mxu0 %v443
        %888 = vmatmul.f32.gmra.mxu0 %v513
        %v889 = vpop.f32.mrf.mxu0
        %v890 = vadd.f32 0.0, %v889
        %891 = vmatmul.f32.gmra.mxu0 %v516
        %v892 = vpop.f32.mrf.mxu0
        %v893 = vadd.f32 0.0, %v892
        %894 = vmatmul.f32.gmra.mxu0 %v519
        %v895 = vpop.f32.mrf.mxu0
        %v896 = vadd.f32 0.0, %v895
        %897 = vmatmul.f32.gmra.mxu0 %v522
        %v898 = vpop.f32.mrf.mxu0
        %v899 = vadd.f32 0.0, %v898
        %900 = vdwg.mxu0
        %901 = vmatpush.msra.mxu0 0.0
        %902 = vmatpush.msra.mxu0 0.0
        %903 = vmatpush.msra.mxu0 0.0
        %904 = vmatpush.msra.mxu0 0.0
        %905 = vmatpush.msra.mxu0 0.0
        %906 = vmatpush.msra.mxu0 0.0
        %907 = vmatpush.msra.mxu0 0.0
        %908 = vmatpush.msra.mxu0 0.0
        %909 = vmatpush.msra.mxu0 0.0
        %910 = vmatpush.msra.mxu0 0.0
        %911 = vmatpush.msra.mxu0 0.0
        %912 = vmatpush.msra.mxu0 0.0
        %913 = vmatpush.msra.mxu0 0.0
        %914 = vmatpush.msra.mxu0 0.0
        %915 = vmatpush.msra.mxu0 %v484
        %916 = vmatpush.msra.mxu0 %v444
        %917 = vmatmul.f32.gmra.mxu0 %v513
        %v918 = vpop.f32.mrf.mxu0
        %v919 = vadd.f32 0.0, %v918
        %920 = vmatmul.f32.gmra.mxu0 %v516
        %v921 = vpop.f32.mrf.mxu0
        %v922 = vadd.f32 0.0, %v921
        %923 = vmatmul.f32.gmra.mxu0 %v519
        %v924 = vpop.f32.mrf.mxu0
        %v925 = vadd.f32 0.0, %v924
        %926 = vmatmul.f32.gmra.mxu0 %v522
        %v927 = vpop.f32.mrf.mxu0
        %v928 = vadd.f32 0.0, %v927
        %929 = vdwg.mxu0
        %930 = vmatpush.msra.mxu0 0.0
        %931 = vmatpush.msra.mxu0 0.0
        %932 = vmatpush.msra.mxu0 0.0
        %933 = vmatpush.msra.mxu0 0.0
        %934 = vmatpush.msra.mxu0 0.0
        %935 = vmatpush.msra.mxu0 0.0
        %936 = vmatpush.msra.mxu0 0.0
        %937 = vmatpush.msra.mxu0 0.0
        %938 = vmatpush.msra.mxu0 0.0
        %939 = vmatpush.msra.mxu0 0.0
        %940 = vmatpush.msra.mxu0 0.0
        %941 = vmatpush.msra.mxu0 0.0
        %942 = vmatpush.msra.mxu0 0.0
        %943 = vmatpush.msra.mxu0 0.0
        %944 = vmatpush.msra.mxu0 %v485
        %945 = vmatpush.msra.mxu0 %v445
        %946 = vmatmul.f32.gmra.mxu0 %v513
        %v947 = vpop.f32.mrf.mxu0
        %v948 = vadd.f32 0.0, %v947
        %949 = vmatmul.f32.gmra.mxu0 %v516
        %v950 = vpop.f32.mrf.mxu0
        %v951 = vadd.f32 0.0, %v950
        %952 = vmatmul.f32.gmra.mxu0 %v519
        %v953 = vpop.f32.mrf.mxu0
        %v954 = vadd.f32 0.0, %v953
        %955 = vmatmul.f32.gmra.mxu0 %v522
        %v956 = vpop.f32.mrf.mxu0
        %v957 = vadd.f32 0.0, %v956
        %958 = vdwg.mxu0
        %959 = vmatpush.msra.mxu0 0.0
        %960 = vmatpush.msra.mxu0 0.0
        %961 = vmatpush.msra.mxu0 0.0
        %962 = vmatpush.msra.mxu0 0.0
        %963 = vmatpush.msra.mxu0 0.0
        %964 = vmatpush.msra.mxu0 0.0
        %965 = vmatpush.msra.mxu0 0.0
        %966 = vmatpush.msra.mxu0 0.0
        %967 = vmatpush.msra.mxu0 0.0
        %968 = vmatpush.msra.mxu0 0.0
        %969 = vmatpush.msra.mxu0 0.0
        %970 = vmatpush.msra.mxu0 0.0
        %971 = vmatpush.msra.mxu0 0.0
        %972 = vmatpush.msra.mxu0 0.0
        %973 = vmatpush.msra.mxu0 %v486
        %974 = vmatpush.msra.mxu0 %v446
        %975 = vmatmul.f32.gmra.mxu0 %v513
        %v976 = vpop.f32.mrf.mxu0
        %v977 = vadd.f32 0.0, %v976
        %978 = vmatmul.f32.gmra.mxu0 %v516
        %v979 = vpop.f32.mrf.mxu0
        %v980 = vadd.f32 0.0, %v979
        %981 = vmatmul.f32.gmra.mxu0 %v519
        %v982 = vpop.f32.mrf.mxu0
        %v983 = vadd.f32 0.0, %v982
        %984 = vmatmul.f32.gmra.mxu0 %v522
        %v985 = vpop.f32.mrf.mxu0
        %v986 = vadd.f32 0.0, %v985
        %987 = vdwg.mxu0
        %988 = vmatpush.msra.mxu0 0.0
        %989 = vmatpush.msra.mxu0 0.0
        %990 = vmatpush.msra.mxu0 0.0
        %991 = vmatpush.msra.mxu0 0.0
        %992 = vmatpush.msra.mxu0 0.0
        %993 = vmatpush.msra.mxu0 0.0
        %994 = vmatpush.msra.mxu0 0.0
        %995 = vmatpush.msra.mxu0 0.0
        %996 = vmatpush.msra.mxu0 0.0
        %997 = vmatpush.msra.mxu0 0.0
        %998 = vmatpush.msra.mxu0 0.0
        %999 = vmatpush.msra.mxu0 0.0
        %1000 = vmatpush.msra.mxu0 0.0
        %1001 = vmatpush.msra.mxu0 0.0
        %1002 = vmatpush.msra.mxu0 %v487
        %1003 = vmatpush.msra.mxu0 %v447
        %1004 = vmatmul.f32.gmra.mxu0 %v513
        %v1005 = vpop.f32.mrf.mxu0
        %v1006 = vadd.f32 0.0, %v1005
        %1007 = vmatmul.f32.gmra.mxu0 %v516
        %v1008 = vpop.f32.mrf.mxu0
        %v1009 = vadd.f32 0.0, %v1008
        %1010 = vmatmul.f32.gmra.mxu0 %v519
        %v1011 = vpop.f32.mrf.mxu0
        %v1012 = vadd.f32 0.0, %v1011
        %1013 = vmatmul.f32.gmra.mxu0 %v522
        %v1014 = vpop.f32.mrf.mxu0
        %v1015 = vadd.f32 0.0, %v1014
        %1016 = vdwg.mxu0
        %1017 = vmatpush.msra.mxu0 0.0
        %1018 = vmatpush.msra.mxu0 0.0
        %1019 = vmatpush.msra.mxu0 0.0
        %1020 = vmatpush.msra.mxu0 0.0
        %1021 = vmatpush.msra.mxu0 0.0
        %1022 = vmatpush.msra.mxu0 0.0
        %1023 = vmatpush.msra.mxu0 0.0
        %1024 = vmatpush.msra.mxu0 0.0
        %1025 = vmatpush.msra.mxu0 0.0
        %1026 = vmatpush.msra.mxu0 0.0
        %1027 = vmatpush.msra.mxu0 0.0
        %1028 = vmatpush.msra.mxu0 0.0
        %1029 = vmatpush.msra.mxu0 0.0
        %1030 = vmatpush.msra.mxu0 0.0
        %1031 = vmatpush.msra.mxu0 %v488
        %1032 = vmatpush.msra.mxu0 %v448
        %1033 = vmatmul.f32.gmra.mxu0 %v513
        %v1034 = vpop.f32.mrf.mxu0
        %v1035 = vadd.f32 0.0, %v1034
        %1036 = vmatmul.f32.gmra.mxu0 %v516
        %v1037 = vpop.f32.mrf.mxu0
        %v1038 = vadd.f32 0.0, %v1037
        %1039 = vmatmul.f32.gmra.mxu0 %v519
        %v1040 = vpop.f32.mrf.mxu0
        %v1041 = vadd.f32 0.0, %v1040
        %1042 = vmatmul.f32.gmra.mxu0 %v522
        %v1043 = vpop.f32.mrf.mxu0
        %v1044 = vadd.f32 0.0, %v1043
        %1045 = vdwg.mxu0
        %1046 = vmatpush.msra.mxu0 0.0
        %1047 = vmatpush.msra.mxu0 0.0
        %1048 = vmatpush.msra.mxu0 0.0
        %1049 = vmatpush.msra.mxu0 0.0
        %1050 = vmatpush.msra.mxu0 0.0
        %1051 = vmatpush.msra.mxu0 0.0
        %1052 = vmatpush.msra.mxu0 0.0
        %1053 = vmatpush.msra.mxu0 0.0
        %1054 = vmatpush.msra.mxu0 0.0
        %1055 = vmatpush.msra.mxu0 0.0
        %1056 = vmatpush.msra.mxu0 0.0
        %1057 = vmatpush.msra.mxu0 0.0
        %1058 = vmatpush.msra.mxu0 0.0
        %1059 = vmatpush.msra.mxu0 0.0
        %1060 = vmatpush.msra.mxu0 %v489
        %1061 = vmatpush.msra.mxu0 %v449
        %1062 = vmatmul.f32.gmra.mxu0 %v513
        %v1063 = vpop.f32.mrf.mxu0
        %v1064 = vadd.f32 0.0, %v1063
        %1065 = vmatmul.f32.gmra.mxu0 %v516
        %v1066 = vpop.f32.mrf.mxu0
        %v1067 = vadd.f32 0.0, %v1066
        %1068 = vmatmul.f32.gmra.mxu0 %v519
        %v1069 = vpop.f32.mrf.mxu0
        %v1070 = vadd.f32 0.0, %v1069
        %1071 = vmatmul.f32.gmra.mxu0 %v522
        %v1072 = vpop.f32.mrf.mxu0
        %v1073 = vadd.f32 0.0, %v1072
        %1074 = vdwg.mxu0
        %1075 = vmatpush.msra.mxu0 0.0
        %1076 = vmatpush.msra.mxu0 0.0
        %1077 = vmatpush.msra.mxu0 0.0
        %1078 = vmatpush.msra.mxu0 0.0
        %1079 = vmatpush.msra.mxu0 0.0
        %1080 = vmatpush.msra.mxu0 0.0
        %1081 = vmatpush.msra.mxu0 0.0
        %1082 = vmatpush.msra.mxu0 0.0
        %1083 = vmatpush.msra.mxu0 0.0
        %1084 = vmatpush.msra.mxu0 0.0
        %1085 = vmatpush.msra.mxu0 0.0
        %1086 = vmatpush.msra.mxu0 0.0
        %1087 = vmatpush.msra.mxu0 0.0
        %1088 = vmatpush.msra.mxu0 0.0
        %1089 = vmatpush.msra.mxu0 %v490
        %1090 = vmatpush.msra.mxu0 %v450
        %1091 = vmatmul.f32.gmra.mxu0 %v513
        %v1092 = vpop.f32.mrf.mxu0
        %v1093 = vadd.f32 0.0, %v1092
        %1094 = vmatmul.f32.gmra.mxu0 %v516
        %v1095 = vpop.f32.mrf.mxu0
        %v1096 = vadd.f32 0.0, %v1095
        %1097 = vmatmul.f32.gmra.mxu0 %v519
        %v1098 = vpop.f32.mrf.mxu0
        %v1099 = vadd.f32 0.0, %v1098
        %1100 = vmatmul.f32.gmra.mxu0 %v522
        %v1101 = vpop.f32.mrf.mxu0
        %v1102 = vadd.f32 0.0, %v1101
        %1103 = vdwg.mxu0
        %1104 = vmatpush.msra.mxu0 0.0
        %1105 = vmatpush.msra.mxu0 0.0
        %1106 = vmatpush.msra.mxu0 0.0
        %1107 = vmatpush.msra.mxu0 0.0
        %1108 = vmatpush.msra.mxu0 0.0
        %1109 = vmatpush.msra.mxu0 0.0
        %1110 = vmatpush.msra.mxu0 0.0
        %1111 = vmatpush.msra.mxu0 0.0
        %1112 = vmatpush.msra.mxu0 0.0
        %1113 = vmatpush.msra.mxu0 0.0
        %1114 = vmatpush.msra.mxu0 0.0
        %1115 = vmatpush.msra.mxu0 0.0
        %1116 = vmatpush.msra.mxu0 0.0
        %1117 = vmatpush.msra.mxu0 0.0
        %1118 = vmatpush.msra.mxu0 %v491
        %1119 = vmatpush.msra.mxu0 %v451
        %1120 = vmatmul.f32.gmra.mxu0 %v513
        %v1121 = vpop.f32.mrf.mxu0
        %v1122 = vadd.f32 0.0, %v1121
        %1123 = vmatmul.f32.gmra.mxu0 %v516
        %v1124 = vpop.f32.mrf.mxu0
        %v1125 = vadd.f32 0.0, %v1124
        %1126 = vmatmul.f32.gmra.mxu0 %v519
        %v1127 = vpop.f32.mrf.mxu0
        %v1128 = vadd.f32 0.0, %v1127
        %1129 = vmatmul.f32.gmra.mxu0 %v522
        %v1130 = vpop.f32.mrf.mxu0
        %v1131 = vadd.f32 0.0, %v1130
        %1132 = vdwg.mxu0
        %1133 = vmatpush.msra.mxu0 0.0
        %1134 = vmatpush.msra.mxu0 0.0
        %1135 = vmatpush.msra.mxu0 0.0
        %1136 = vmatpush.msra.mxu0 0.0
        %1137 = vmatpush.msra.mxu0 0.0
        %1138 = vmatpush.msra.mxu0 0.0
        %1139 = vmatpush.msra.mxu0 0.0
        %1140 = vmatpush.msra.mxu0 0.0
        %1141 = vmatpush.msra.mxu0 0.0
        %1142 = vmatpush.msra.mxu0 0.0
        %1143 = vmatpush.msra.mxu0 0.0
        %1144 = vmatpush.msra.mxu0 0.0
        %1145 = vmatpush.msra.mxu0 0.0
        %1146 = vmatpush.msra.mxu0 0.0
        %1147 = vmatpush.msra.mxu0 %v492
        %1148 = vmatpush.msra.mxu0 %v452
        %1149 = vmatmul.f32.gmra.mxu0 %v513
        %v1150 = vpop.f32.mrf.mxu0
        %v1151 = vadd.f32 0.0, %v1150
        %1152 = vmatmul.f32.gmra.mxu0 %v516
        %v1153 = vpop.f32.mrf.mxu0
        %v1154 = vadd.f32 0.0, %v1153
        %1155 = vmatmul.f32.gmra.mxu0 %v519
        %v1156 = vpop.f32.mrf.mxu0
        %v1157 = vadd.f32 0.0, %v1156
        %1158 = vmatmul.f32.gmra.mxu0 %v522
        %v1159 = vpop.f32.mrf.mxu0
        %v1160 = vadd.f32 0.0, %v1159
        %1161 = vdwg.mxu0
        %1162 = vmatpush.msra.mxu0 0.0
        %1163 = vmatpush.msra.mxu0 0.0
        %1164 = vmatpush.msra.mxu0 0.0
        %1165 = vmatpush.msra.mxu0 0.0
        %1166 = vmatpush.msra.mxu0 0.0
        %1167 = vmatpush.msra.mxu0 0.0
        %1168 = vmatpush.msra.mxu0 0.0
        %1169 = vmatpush.msra.mxu0 0.0
        %1170 = vmatpush.msra.mxu0 0.0
        %1171 = vmatpush.msra.mxu0 0.0
        %1172 = vmatpush.msra.mxu0 0.0
        %1173 = vmatpush.msra.mxu0 0.0
        %1174 = vmatpush.msra.mxu0 0.0
        %1175 = vmatpush.msra.mxu0 0.0
        %1176 = vmatpush.msra.mxu0 %v493
        %1177 = vmatpush.msra.mxu0 %v453
        %1178 = vmatmul.f32.gmra.mxu0 %v513
        %v1179 = vpop.f32.mrf.mxu0
        %v1180 = vadd.f32 0.0, %v1179
        %1181 = vmatmul.f32.gmra.mxu0 %v516
        %v1182 = vpop.f32.mrf.mxu0
        %v1183 = vadd.f32 0.0, %v1182
        %1184 = vmatmul.f32.gmra.mxu0 %v519
        %v1185 = vpop.f32.mrf.mxu0
        %v1186 = vadd.f32 0.0, %v1185
        %1187 = vmatmul.f32.gmra.mxu0 %v522
        %v1188 = vpop.f32.mrf.mxu0
        %v1189 = vadd.f32 0.0, %v1188
        %1190 = vdwg.mxu0
        %1191 = vmatpush.msra.mxu0 0.0
        %1192 = vmatpush.msra.mxu0 0.0
        %1193 = vmatpush.msra.mxu0 0.0
        %1194 = vmatpush.msra.mxu0 0.0
        %1195 = vmatpush.msra.mxu0 0.0
        %1196 = vmatpush.msra.mxu0 0.0
        %1197 = vmatpush.msra.mxu0 0.0
        %1198 = vmatpush.msra.mxu0 0.0
        %1199 = vmatpush.msra.mxu0 0.0
        %1200 = vmatpush.msra.mxu0 0.0
        %1201 = vmatpush.msra.mxu0 0.0
        %1202 = vmatpush.msra.mxu0 0.0
        %1203 = vmatpush.msra.mxu0 0.0
        %1204 = vmatpush.msra.mxu0 0.0
        %1205 = vmatpush.msra.mxu0 %v494
        %1206 = vmatpush.msra.mxu0 %v454
        %1207 = vmatmul.f32.gmra.mxu0 %v513
        %v1208 = vpop.f32.mrf.mxu0
        %v1209 = vadd.f32 0.0, %v1208
        %1210 = vmatmul.f32.gmra.mxu0 %v516
        %v1211 = vpop.f32.mrf.mxu0
        %v1212 = vadd.f32 0.0, %v1211
        %1213 = vmatmul.f32.gmra.mxu0 %v519
        %v1214 = vpop.f32.mrf.mxu0
        %v1215 = vadd.f32 0.0, %v1214
        %1216 = vmatmul.f32.gmra.mxu0 %v522
        %v1217 = vpop.f32.mrf.mxu0
        %v1218 = vadd.f32 0.0, %v1217
        %1219 = vdwg.mxu0
        %1220 = vmatpush.msra.mxu0 0.0
        %1221 = vmatpush.msra.mxu0 0.0
        %1222 = vmatpush.msra.mxu0 0.0
        %1223 = vmatpush.msra.mxu0 0.0
        %1224 = vmatpush.msra.mxu0 0.0
        %1225 = vmatpush.msra.mxu0 0.0
        %1226 = vmatpush.msra.mxu0 0.0
        %1227 = vmatpush.msra.mxu0 0.0
        %1228 = vmatpush.msra.mxu0 0.0
        %1229 = vmatpush.msra.mxu0 0.0
        %1230 = vmatpush.msra.mxu0 0.0
        %1231 = vmatpush.msra.mxu0 0.0
        %1232 = vmatpush.msra.mxu0 0.0
        %1233 = vmatpush.msra.mxu0 0.0
        %1234 = vmatpush.msra.mxu0 %v495
        %1235 = vmatpush.msra.mxu0 %v455
        %1236 = vmatmul.f32.gmra.mxu0 %v513
        %v1237 = vpop.f32.mrf.mxu0
        %v1238 = vadd.f32 0.0, %v1237
        %1239 = vmatmul.f32.gmra.mxu0 %v516
        %v1240 = vpop.f32.mrf.mxu0
        %v1241 = vadd.f32 0.0, %v1240
        %1242 = vmatmul.f32.gmra.mxu0 %v519
        %v1243 = vpop.f32.mrf.mxu0
        %v1244 = vadd.f32 0.0, %v1243
        %1245 = vmatmul.f32.gmra.mxu0 %v522
        %v1246 = vpop.f32.mrf.mxu0
        %v1247 = vadd.f32 0.0, %v1246
        %1248 = vdwg.mxu0
        %1249 = vmatpush.msra.mxu0 0.0
        %1250 = vmatpush.msra.mxu0 0.0
        %1251 = vmatpush.msra.mxu0 0.0
        %1252 = vmatpush.msra.mxu0 0.0
        %1253 = vmatpush.msra.mxu0 0.0
        %1254 = vmatpush.msra.mxu0 0.0
        %1255 = vmatpush.msra.mxu0 0.0
        %1256 = vmatpush.msra.mxu0 0.0
        %1257 = vmatpush.msra.mxu0 0.0
        %1258 = vmatpush.msra.mxu0 0.0
        %1259 = vmatpush.msra.mxu0 0.0
        %1260 = vmatpush.msra.mxu0 0.0
        %1261 = vmatpush.msra.mxu0 0.0
        %1262 = vmatpush.msra.mxu0 0.0
        %1263 = vmatpush.msra.mxu0 %v496
        %1264 = vmatpush.msra.mxu0 %v456
        %1265 = vmatmul.f32.gmra.mxu0 %v513
        %v1266 = vpop.f32.mrf.mxu0
        %v1267 = vadd.f32 0.0, %v1266
        %1268 = vmatmul.f32.gmra.mxu0 %v516
        %v1269 = vpop.f32.mrf.mxu0
        %v1270 = vadd.f32 0.0, %v1269
        %1271 = vmatmul.f32.gmra.mxu0 %v519
        %v1272 = vpop.f32.mrf.mxu0
        %v1273 = vadd.f32 0.0, %v1272
        %1274 = vmatmul.f32.gmra.mxu0 %v522
        %v1275 = vpop.f32.mrf.mxu0
        %v1276 = vadd.f32 0.0, %v1275
        %1277 = vdwg.mxu0
        %1278 = vmatpush.msra.mxu0 0.0
        %1279 = vmatpush.msra.mxu0 0.0
        %1280 = vmatpush.msra.mxu0 0.0
        %1281 = vmatpush.msra.mxu0 0.0
        %1282 = vmatpush.msra.mxu0 0.0
        %1283 = vmatpush.msra.mxu0 0.0
        %1284 = vmatpush.msra.mxu0 0.0
        %1285 = vmatpush.msra.mxu0 0.0
        %1286 = vmatpush.msra.mxu0 0.0
        %1287 = vmatpush.msra.mxu0 0.0
        %1288 = vmatpush.msra.mxu0 0.0
        %1289 = vmatpush.msra.mxu0 0.0
        %1290 = vmatpush.msra.mxu0 0.0
        %1291 = vmatpush.msra.mxu0 0.0
        %1292 = vmatpush.msra.mxu0 %v497
        %1293 = vmatpush.msra.mxu0 %v457
        %1294 = vmatmul.f32.gmra.mxu0 %v513
        %v1295 = vpop.f32.mrf.mxu0
        %v1296 = vadd.f32 0.0, %v1295
        %1297 = vmatmul.f32.gmra.mxu0 %v516
        %v1298 = vpop.f32.mrf.mxu0
        %v1299 = vadd.f32 0.0, %v1298
        %1300 = vmatmul.f32.gmra.mxu0 %v519
        %v1301 = vpop.f32.mrf.mxu0
        %v1302 = vadd.f32 0.0, %v1301
        %1303 = vmatmul.f32.gmra.mxu0 %v522
        %v1304 = vpop.f32.mrf.mxu0
        %v1305 = vadd.f32 0.0, %v1304
        %1306 = vdwg.mxu0
        %1307 = vmatpush.msra.mxu0 0.0
        %1308 = vmatpush.msra.mxu0 0.0
        %1309 = vmatpush.msra.mxu0 0.0
        %1310 = vmatpush.msra.mxu0 0.0
        %1311 = vmatpush.msra.mxu0 0.0
        %1312 = vmatpush.msra.mxu0 0.0
        %1313 = vmatpush.msra.mxu0 0.0
        %1314 = vmatpush.msra.mxu0 0.0
        %1315 = vmatpush.msra.mxu0 0.0
        %1316 = vmatpush.msra.mxu0 0.0
        %1317 = vmatpush.msra.mxu0 0.0
        %1318 = vmatpush.msra.mxu0 0.0
        %1319 = vmatpush.msra.mxu0 0.0
        %1320 = vmatpush.msra.mxu0 0.0
        %1321 = vmatpush.msra.mxu0 %v498
        %1322 = vmatpush.msra.mxu0 %v458
        %1323 = vmatmul.f32.gmra.mxu0 %v513
        %v1324 = vpop.f32.mrf.mxu0
        %v1325 = vadd.f32 0.0, %v1324
        %1326 = vmatmul.f32.gmra.mxu0 %v516
        %v1327 = vpop.f32.mrf.mxu0
        %v1328 = vadd.f32 0.0, %v1327
        %1329 = vmatmul.f32.gmra.mxu0 %v519
        %v1330 = vpop.f32.mrf.mxu0
        %v1331 = vadd.f32 0.0, %v1330
        %1332 = vmatmul.f32.gmra.mxu0 %v522
        %v1333 = vpop.f32.mrf.mxu0
        %v1334 = vadd.f32 0.0, %v1333
        %1335 = vdwg.mxu0
        %1336 = vmatpush.msra.mxu0 0.0
        %1337 = vmatpush.msra.mxu0 0.0
        %1338 = vmatpush.msra.mxu0 0.0
        %1339 = vmatpush.msra.mxu0 0.0
        %1340 = vmatpush.msra.mxu0 0.0
        %1341 = vmatpush.msra.mxu0 0.0
        %1342 = vmatpush.msra.mxu0 0.0
        %1343 = vmatpush.msra.mxu0 0.0
        %1344 = vmatpush.msra.mxu0 0.0
        %1345 = vmatpush.msra.mxu0 0.0
        %1346 = vmatpush.msra.mxu0 0.0
        %1347 = vmatpush.msra.mxu0 0.0
        %1348 = vmatpush.msra.mxu0 0.0
        %1349 = vmatpush.msra.mxu0 0.0
        %1350 = vmatpush.msra.mxu0 %v499
        %1351 = vmatpush.msra.mxu0 %v459
        %1352 = vmatmul.f32.gmra.mxu0 %v513
        %v1353 = vpop.f32.mrf.mxu0
        %v1354 = vadd.f32 0.0, %v1353
        %1355 = vmatmul.f32.gmra.mxu0 %v516
        %v1356 = vpop.f32.mrf.mxu0
        %v1357 = vadd.f32 0.0, %v1356
        %1358 = vmatmul.f32.gmra.mxu0 %v519
        %v1359 = vpop.f32.mrf.mxu0
        %v1360 = vadd.f32 0.0, %v1359
        %1361 = vmatmul.f32.gmra.mxu0 %v522
        %v1362 = vpop.f32.mrf.mxu0
        %v1363 = vadd.f32 0.0, %v1362
        %1364 = vdwg.mxu0
        %1365 = vmatpush.msra.mxu0 0.0
        %1366 = vmatpush.msra.mxu0 0.0
        %1367 = vmatpush.msra.mxu0 0.0
        %1368 = vmatpush.msra.mxu0 0.0
        %1369 = vmatpush.msra.mxu0 0.0
        %1370 = vmatpush.msra.mxu0 0.0
        %1371 = vmatpush.msra.mxu0 0.0
        %1372 = vmatpush.msra.mxu0 0.0
        %1373 = vmatpush.msra.mxu0 0.0
        %1374 = vmatpush.msra.mxu0 0.0
        %1375 = vmatpush.msra.mxu0 0.0
        %1376 = vmatpush.msra.mxu0 0.0
        %1377 = vmatpush.msra.mxu0 0.0
        %1378 = vmatpush.msra.mxu0 0.0
        %1379 = vmatpush.msra.mxu0 %v500
        %1380 = vmatpush.msra.mxu0 %v460
        %1381 = vmatmul.f32.gmra.mxu0 %v513
        %v1382 = vpop.f32.mrf.mxu0
        %v1383 = vadd.f32 0.0, %v1382
        %1384 = vmatmul.f32.gmra.mxu0 %v516
        %v1385 = vpop.f32.mrf.mxu0
        %v1386 = vadd.f32 0.0, %v1385
        %1387 = vmatmul.f32.gmra.mxu0 %v519
        %v1388 = vpop.f32.mrf.mxu0
        %v1389 = vadd.f32 0.0, %v1388
        %1390 = vmatmul.f32.gmra.mxu0 %v522
        %v1391 = vpop.f32.mrf.mxu0
        %v1392 = vadd.f32 0.0, %v1391
        %1393 = vdwg.mxu0
        %1394 = vmatpush.msra.mxu0 0.0
        %1395 = vmatpush.msra.mxu0 0.0
        %1396 = vmatpush.msra.mxu0 0.0
        %1397 = vmatpush.msra.mxu0 0.0
        %1398 = vmatpush.msra.mxu0 0.0
        %1399 = vmatpush.msra.mxu0 0.0
        %1400 = vmatpush.msra.mxu0 0.0
        %1401 = vmatpush.msra.mxu0 0.0
        %1402 = vmatpush.msra.mxu0 0.0
        %1403 = vmatpush.msra.mxu0 0.0
        %1404 = vmatpush.msra.mxu0 0.0
        %1405 = vmatpush.msra.mxu0 0.0
        %1406 = vmatpush.msra.mxu0 0.0
        %1407 = vmatpush.msra.mxu0 0.0
        %1408 = vmatpush.msra.mxu0 %v501
        %1409 = vmatpush.msra.mxu0 %v461
        %1410 = vmatmul.f32.gmra.mxu0 %v513
        %v1411 = vpop.f32.mrf.mxu0
        %v1412 = vadd.f32 0.0, %v1411
        %1413 = vmatmul.f32.gmra.mxu0 %v516
        %v1414 = vpop.f32.mrf.mxu0
        %v1415 = vadd.f32 0.0, %v1414
        %1416 = vmatmul.f32.gmra.mxu0 %v519
        %v1417 = vpop.f32.mrf.mxu0
        %v1418 = vadd.f32 0.0, %v1417
        %1419 = vmatmul.f32.gmra.mxu0 %v522
        %v1420 = vpop.f32.mrf.mxu0
        %v1421 = vadd.f32 0.0, %v1420
        %1422 = vdwg.mxu0
        %1423 = vmatpush.msra.mxu0 0.0
        %1424 = vmatpush.msra.mxu0 0.0
        %1425 = vmatpush.msra.mxu0 0.0
        %1426 = vmatpush.msra.mxu0 0.0
        %1427 = vmatpush.msra.mxu0 0.0
        %1428 = vmatpush.msra.mxu0 0.0
        %1429 = vmatpush.msra.mxu0 0.0
        %1430 = vmatpush.msra.mxu0 0.0
        %1431 = vmatpush.msra.mxu0 0.0
        %1432 = vmatpush.msra.mxu0 0.0
        %1433 = vmatpush.msra.mxu0 0.0
        %1434 = vmatpush.msra.mxu0 0.0
        %1435 = vmatpush.msra.mxu0 0.0
        %1436 = vmatpush.msra.mxu0 0.0
        %1437 = vmatpush.msra.mxu0 %v502
        %1438 = vmatpush.msra.mxu0 %v462
        %1439 = vmatmul.f32.gmra.mxu0 %v513
        %v1440 = vpop.f32.mrf.mxu0
        %v1441 = vadd.f32 0.0, %v1440
        %1442 = vmatmul.f32.gmra.mxu0 %v516
        %v1443 = vpop.f32.mrf.mxu0
        %v1444 = vadd.f32 0.0, %v1443
        %1445 = vmatmul.f32.gmra.mxu0 %v519
        %v1446 = vpop.f32.mrf.mxu0
        %v1447 = vadd.f32 0.0, %v1446
        %1448 = vmatmul.f32.gmra.mxu0 %v522
        %v1449 = vpop.f32.mrf.mxu0
        %v1450 = vadd.f32 0.0, %v1449
        %1451 = vdwg.mxu0
        %1452 = vmatpush.msra.mxu0 0.0
        %1453 = vmatpush.msra.mxu0 0.0
        %1454 = vmatpush.msra.mxu0 0.0
        %1455 = vmatpush.msra.mxu0 0.0
        %1456 = vmatpush.msra.mxu0 0.0
        %1457 = vmatpush.msra.mxu0 0.0
        %1458 = vmatpush.msra.mxu0 0.0
        %1459 = vmatpush.msra.mxu0 0.0
        %1460 = vmatpush.msra.mxu0 0.0
        %1461 = vmatpush.msra.mxu0 0.0
        %1462 = vmatpush.msra.mxu0 0.0
        %1463 = vmatpush.msra.mxu0 0.0
        %1464 = vmatpush.msra.mxu0 0.0
        %1465 = vmatpush.msra.mxu0 0.0
        %1466 = vmatpush.msra.mxu0 %v503
        %1467 = vmatpush.msra.mxu0 %v463
        %1468 = vmatmul.f32.gmra.mxu0 %v513
        %v1469 = vpop.f32.mrf.mxu0
        %v1470 = vadd.f32 0.0, %v1469
        %1471 = vmatmul.f32.gmra.mxu0 %v516
        %v1472 = vpop.f32.mrf.mxu0
        %v1473 = vadd.f32 0.0, %v1472
        %1474 = vmatmul.f32.gmra.mxu0 %v519
        %v1475 = vpop.f32.mrf.mxu0
        %v1476 = vadd.f32 0.0, %v1475
        %1477 = vmatmul.f32.gmra.mxu0 %v522
        %v1478 = vpop.f32.mrf.mxu0
        %v1479 = vadd.f32 0.0, %v1478
        %1480 = vdwg.mxu0
        %1481 = vmatpush.msra.mxu0 0.0
        %1482 = vmatpush.msra.mxu0 0.0
        %1483 = vmatpush.msra.mxu0 0.0
        %1484 = vmatpush.msra.mxu0 0.0
        %1485 = vmatpush.msra.mxu0 0.0
        %1486 = vmatpush.msra.mxu0 0.0
        %1487 = vmatpush.msra.mxu0 0.0
        %1488 = vmatpush.msra.mxu0 0.0
        %1489 = vmatpush.msra.mxu0 0.0
        %1490 = vmatpush.msra.mxu0 0.0
        %1491 = vmatpush.msra.mxu0 0.0
        %1492 = vmatpush.msra.mxu0 0.0
        %1493 = vmatpush.msra.mxu0 0.0
        %1494 = vmatpush.msra.mxu0 0.0
        %1495 = vmatpush.msra.mxu0 %v504
        %1496 = vmatpush.msra.mxu0 %v464
        %1497 = vmatmul.f32.gmra.mxu0 %v513
        %v1498 = vpop.f32.mrf.mxu0
        %v1499 = vadd.f32 0.0, %v1498
        %1500 = vmatmul.f32.gmra.mxu0 %v516
        %v1501 = vpop.f32.mrf.mxu0
        %v1502 = vadd.f32 0.0, %v1501
        %1503 = vmatmul.f32.gmra.mxu0 %v519
        %v1504 = vpop.f32.mrf.mxu0
        %v1505 = vadd.f32 0.0, %v1504
        %1506 = vmatmul.f32.gmra.mxu0 %v522
        %v1507 = vpop.f32.mrf.mxu0
        %v1508 = vadd.f32 0.0, %v1507
        %1509 = vdwg.mxu0
        %1510 = vmatpush.msra.mxu0 0.0
        %1511 = vmatpush.msra.mxu0 0.0
        %1512 = vmatpush.msra.mxu0 0.0
        %1513 = vmatpush.msra.mxu0 0.0
        %1514 = vmatpush.msra.mxu0 0.0
        %1515 = vmatpush.msra.mxu0 0.0
        %1516 = vmatpush.msra.mxu0 0.0
        %1517 = vmatpush.msra.mxu0 0.0
        %1518 = vmatpush.msra.mxu0 0.0
        %1519 = vmatpush.msra.mxu0 0.0
        %1520 = vmatpush.msra.mxu0 0.0
        %1521 = vmatpush.msra.mxu0 0.0
        %1522 = vmatpush.msra.mxu0 0.0
        %1523 = vmatpush.msra.mxu0 0.0
        %1524 = vmatpush.msra.mxu0 %v505
        %1525 = vmatpush.msra.mxu0 %v465
        %1526 = vmatmul.f32.gmra.mxu0 %v513
        %v1527 = vpop.f32.mrf.mxu0
        %v1528 = vadd.f32 0.0, %v1527
        %1529 = vmatmul.f32.gmra.mxu0 %v516
        %v1530 = vpop.f32.mrf.mxu0
        %v1531 = vadd.f32 0.0, %v1530
        %1532 = vmatmul.f32.gmra.mxu0 %v519
        %v1533 = vpop.f32.mrf.mxu0
        %v1534 = vadd.f32 0.0, %v1533
        %1535 = vmatmul.f32.gmra.mxu0 %v522
        %v1536 = vpop.f32.mrf.mxu0
        %v1537 = vadd.f32 0.0, %v1536
        %1538 = vdwg.mxu0
        %1539 = vmatpush.msra.mxu0 0.0
        %1540 = vmatpush.msra.mxu0 0.0
        %1541 = vmatpush.msra.mxu0 0.0
        %1542 = vmatpush.msra.mxu0 0.0
        %1543 = vmatpush.msra.mxu0 0.0
        %1544 = vmatpush.msra.mxu0 0.0
        %1545 = vmatpush.msra.mxu0 0.0
        %1546 = vmatpush.msra.mxu0 0.0
        %1547 = vmatpush.msra.mxu0 0.0
        %1548 = vmatpush.msra.mxu0 0.0
        %1549 = vmatpush.msra.mxu0 0.0
        %1550 = vmatpush.msra.mxu0 0.0
        %1551 = vmatpush.msra.mxu0 0.0
        %1552 = vmatpush.msra.mxu0 0.0
        %1553 = vmatpush.msra.mxu0 %v506
        %1554 = vmatpush.msra.mxu0 %v466
        %1555 = vmatmul.f32.gmra.mxu0 %v513
        %v1556 = vpop.f32.mrf.mxu0
        %v1557 = vadd.f32 0.0, %v1556
        %1558 = vmatmul.f32.gmra.mxu0 %v516
        %v1559 = vpop.f32.mrf.mxu0
        %v1560 = vadd.f32 0.0, %v1559
        %1561 = vmatmul.f32.gmra.mxu0 %v519
        %v1562 = vpop.f32.mrf.mxu0
        %v1563 = vadd.f32 0.0, %v1562
        %1564 = vmatmul.f32.gmra.mxu0 %v522
        %v1565 = vpop.f32.mrf.mxu0
        %v1566 = vadd.f32 0.0, %v1565
        %1567 = vdwg.mxu0
        %1568 = vmatpush.msra.mxu0 0.0
        %1569 = vmatpush.msra.mxu0 0.0
        %1570 = vmatpush.msra.mxu0 0.0
        %1571 = vmatpush.msra.mxu0 0.0
        %1572 = vmatpush.msra.mxu0 0.0
        %1573 = vmatpush.msra.mxu0 0.0
        %1574 = vmatpush.msra.mxu0 0.0
        %1575 = vmatpush.msra.mxu0 0.0
        %1576 = vmatpush.msra.mxu0 0.0
        %1577 = vmatpush.msra.mxu0 0.0
        %1578 = vmatpush.msra.mxu0 0.0
        %1579 = vmatpush.msra.mxu0 0.0
        %1580 = vmatpush.msra.mxu0 0.0
        %1581 = vmatpush.msra.mxu0 0.0
        %1582 = vmatpush.msra.mxu0 %v507
        %1583 = vmatpush.msra.mxu0 %v467
        %1584 = vmatmul.f32.gmra.mxu0 %v513
        %v1585 = vpop.f32.mrf.mxu0
        %v1586 = vadd.f32 0.0, %v1585
        %1587 = vmatmul.f32.gmra.mxu0 %v516
        %v1588 = vpop.f32.mrf.mxu0
        %v1589 = vadd.f32 0.0, %v1588
        %1590 = vmatmul.f32.gmra.mxu0 %v519
        %v1591 = vpop.f32.mrf.mxu0
        %v1592 = vadd.f32 0.0, %v1591
        %1593 = vmatmul.f32.gmra.mxu0 %v522
        %v1594 = vpop.f32.mrf.mxu0
        %v1595 = vadd.f32 0.0, %v1594
        %1596 = vdwg.mxu0
        %1597 = vmatpush.msra.mxu0 0.0
        %1598 = vmatpush.msra.mxu0 0.0
        %1599 = vmatpush.msra.mxu0 0.0
        %1600 = vmatpush.msra.mxu0 0.0
        %1601 = vmatpush.msra.mxu0 0.0
        %1602 = vmatpush.msra.mxu0 0.0
        %1603 = vmatpush.msra.mxu0 0.0
        %1604 = vmatpush.msra.mxu0 0.0
        %1605 = vmatpush.msra.mxu0 0.0
        %1606 = vmatpush.msra.mxu0 0.0
        %1607 = vmatpush.msra.mxu0 0.0
        %1608 = vmatpush.msra.mxu0 0.0
        %1609 = vmatpush.msra.mxu0 0.0
        %1610 = vmatpush.msra.mxu0 0.0
        %1611 = vmatpush.msra.mxu0 %v508
        %1612 = vmatpush.msra.mxu0 %v468
        %1613 = vmatmul.f32.gmra.mxu0 %v513
        %v1614 = vpop.f32.mrf.mxu0
        %v1615 = vadd.f32 0.0, %v1614
        %1616 = vmatmul.f32.gmra.mxu0 %v516
        %v1617 = vpop.f32.mrf.mxu0
        %v1618 = vadd.f32 0.0, %v1617
        %1619 = vmatmul.f32.gmra.mxu0 %v519
        %v1620 = vpop.f32.mrf.mxu0
        %v1621 = vadd.f32 0.0, %v1620
        %1622 = vmatmul.f32.gmra.mxu0 %v522
        %v1623 = vpop.f32.mrf.mxu0
        %v1624 = vadd.f32 0.0, %v1623
        %1625 = vdwg.mxu0
        %1626 = vmatpush.msra.mxu0 0.0
        %1627 = vmatpush.msra.mxu0 0.0
        %1628 = vmatpush.msra.mxu0 0.0
        %1629 = vmatpush.msra.mxu0 0.0
        %1630 = vmatpush.msra.mxu0 0.0
        %1631 = vmatpush.msra.mxu0 0.0
        %1632 = vmatpush.msra.mxu0 0.0
        %1633 = vmatpush.msra.mxu0 0.0
        %1634 = vmatpush.msra.mxu0 0.0
        %1635 = vmatpush.msra.mxu0 0.0
        %1636 = vmatpush.msra.mxu0 0.0
        %1637 = vmatpush.msra.mxu0 0.0
        %1638 = vmatpush.msra.mxu0 0.0
        %1639 = vmatpush.msra.mxu0 0.0
        %1640 = vmatpush.msra.mxu0 %v509
        %1641 = vmatpush.msra.mxu0 %v469
        %1642 = vmatmul.f32.gmra.mxu0 %v513
        %v1643 = vpop.f32.mrf.mxu0
        %v1644 = vadd.f32 0.0, %v1643
        %1645 = vmatmul.f32.gmra.mxu0 %v516
        %v1646 = vpop.f32.mrf.mxu0
        %v1647 = vadd.f32 0.0, %v1646
        %1648 = vmatmul.f32.gmra.mxu0 %v519
        %v1649 = vpop.f32.mrf.mxu0
        %v1650 = vadd.f32 0.0, %v1649
        %1651 = vmatmul.f32.gmra.mxu0 %v522
        %v1652 = vpop.f32.mrf.mxu0
        %v1653 = vadd.f32 0.0, %v1652
        %1654 = vdwg.mxu0
        %1655 = vmatpush.msra.mxu0 0.0
        %1656 = vmatpush.msra.mxu0 0.0
        %1657 = vmatpush.msra.mxu0 0.0
        %1658 = vmatpush.msra.mxu0 0.0
        %1659 = vmatpush.msra.mxu0 0.0
        %1660 = vmatpush.msra.mxu0 0.0
        %1661 = vmatpush.msra.mxu0 0.0
        %1662 = vmatpush.msra.mxu0 0.0
        %1663 = vmatpush.msra.mxu0 0.0
        %1664 = vmatpush.msra.mxu0 0.0
        %1665 = vmatpush.msra.mxu0 0.0
        %1666 = vmatpush.msra.mxu0 0.0
        %1667 = vmatpush.msra.mxu0 0.0
        %1668 = vmatpush.msra.mxu0 0.0
        %1669 = vmatpush.msra.mxu0 %v510
        %1670 = vmatpush.msra.mxu0 %v470
        %1671 = vmatmul.f32.gmra.mxu0 %v513
        %v1672 = vpop.f32.mrf.mxu0
        %v1673 = vadd.f32 0.0, %v1672
        %1674 = vmatmul.f32.gmra.mxu0 %v516
        %v1675 = vpop.f32.mrf.mxu0
        %v1676 = vadd.f32 0.0, %v1675
        %1677 = vmatmul.f32.gmra.mxu0 %v519
        %v1678 = vpop.f32.mrf.mxu0
        %v1679 = vadd.f32 0.0, %v1678
        %1680 = vmatmul.f32.gmra.mxu0 %v522
        %v1681 = vpop.f32.mrf.mxu0
        %v1682 = vadd.f32 0.0, %v1681
        %1683 = vdwg.mxu0
        %1684 = vst [vmem:[%s416] sm:$0xff] %v542
        %1685 = vst [vmem:[%s416 + $0x8] sm:$0xff] %v571
        %1686 = vst [vmem:[%s416 + $0x10] sm:$0xff] %v600
        %1687 = vst [vmem:[%s416 + $0x18] sm:$0xff] %v629
        %1688 = vst [vmem:[%s416 + $0x20] sm:$0xff] %v658
        %1689 = vst [vmem:[%s416 + $0x28] sm:$0xff] %v687
        %1690 = vst [vmem:[%s416 + $0x30] sm:$0xff] %v716
        %1691 = vst [vmem:[%s416 + $0x38] sm:$0xff] %v745
        %1692 = vst [vmem:[%s416 + $0x40] sm:$0xff] %v774
        %1693 = vst [vmem:[%s416 + $0x48] sm:$0xff] %v803
        %1694 = vst [vmem:[%s416 + $0x50] sm:$0xff] %v832
        %1695 = vst [vmem:[%s416 + $0x58] sm:$0xff] %v861
        %1696 = vst [vmem:[%s416 + $0x60] sm:$0xff] %v890
        %1697 = vst [vmem:[%s416 + $0x68] sm:$0xff] %v919
        %1698 = vst [vmem:[%s416 + $0x70] sm:$0xff] %v948
        %1699 = vst [vmem:[%s416 + $0x78] sm:$0xff] %v977
        %1700 = vst [vmem:[%s416 + $0x80] sm:$0xff] %v1006
        %1701 = vst [vmem:[%s416 + $0x88] sm:$0xff] %v1035
        %1702 = vst [vmem:[%s416 + $0x90] sm:$0xff] %v1064
        %1703 = vst [vmem:[%s416 + $0x98] sm:$0xff] %v1093
        %1704 = vst [vmem:[%s416 + $0xa0] sm:$0xff] %v1122
        %1705 = vst [vmem:[%s416 + $0xa8] sm:$0xff] %v1151
        %1706 = vst [vmem:[%s416 + $0xb0] sm:$0xff] %v1180
        %1707 = vst [vmem:[%s416 + $0xb8] sm:$0xff] %v1209
        %1708 = vst [vmem:[%s416 + $0xc0] sm:$0xff] %v1238
        %1709 = vst [vmem:[%s416 + $0xc8] sm:$0xff] %v1267
        %1710 = vst [vmem:[%s416 + $0xd0] sm:$0xff] %v1296
        %1711 = vst [vmem:[%s416 + $0xd8] sm:$0xff] %v1325
        %1712 = vst [vmem:[%s416 + $0xe0] sm:$0xff] %v1354
        %1713 = vst [vmem:[%s416 + $0xe8] sm:$0xff] %v1383
        %1714 = vst [vmem:[%s416 + $0xf0] sm:$0xff] %v1412
        %1715 = vst [vmem:[%s416 + $0xf8] sm:$0xff] %v1441
        %1716 = vst [vmem:[%s416 + $0x100] sm:$0xff] %v1470
        %1717 = vst [vmem:[%s416 + $0x108] sm:$0xff] %v1499
        %1718 = vst [vmem:[%s416 + $0x110] sm:$0xff] %v1528
        %1719 = vst [vmem:[%s416 + $0x118] sm:$0xff] %v1557
        %1720 = vst [vmem:[%s416 + $0x120] sm:$0xff] %v1586
        %1721 = vst [vmem:[%s416 + $0x128] sm:$0xff] %v1615
        %1722 = vst [vmem:[%s416 + $0x130] sm:$0xff] %v1644
        %1723 = vst [vmem:[%s416 + $0x138] sm:$0xff] %v1673
        %1724 = vst [vmem:[%s416 + $0x140] sm:$0xff] %v545
        %1725 = vst [vmem:[%s416 + $0x148] sm:$0xff] %v574
        %1726 = vst [vmem:[%s416 + $0x150] sm:$0xff] %v603
        %1727 = vst [vmem:[%s416 + $0x158] sm:$0xff] %v632
        %1728 = vst [vmem:[%s416 + $0x160] sm:$0xff] %v661
        %1729 = vst [vmem:[%s416 + $0x168] sm:$0xff] %v690
        %1730 = vst [vmem:[%s416 + $0x170] sm:$0xff] %v719
        %1731 = vst [vmem:[%s416 + $0x178] sm:$0xff] %v748
        %1732 = vst [vmem:[%s416 + $0x180] sm:$0xff] %v777
        %1733 = vst [vmem:[%s416 + $0x188] sm:$0xff] %v806
        %1734 = vst [vmem:[%s416 + $0x190] sm:$0xff] %v835
        %1735 = vst [vmem:[%s416 + $0x198] sm:$0xff] %v864
        %1736 = vst [vmem:[%s416 + $0x1a0] sm:$0xff] %v893
        %1737 = vst [vmem:[%s416 + $0x1a8] sm:$0xff] %v922
        %1738 = vst [vmem:[%s416 + $0x1b0] sm:$0xff] %v951
        %1739 = vst [vmem:[%s416 + $0x1b8] sm:$0xff] %v980
        %1740 = vst [vmem:[%s416 + $0x1c0] sm:$0xff] %v1009
        %1741 = vst [vmem:[%s416 + $0x1c8] sm:$0xff] %v1038
        %1742 = vst [vmem:[%s416 + $0x1d0] sm:$0xff] %v1067
        %1743 = vst [vmem:[%s416 + $0x1d8] sm:$0xff] %v1096
        %1744 = vst [vmem:[%s416 + $0x1e0] sm:$0xff] %v1125
        %1745 = vst [vmem:[%s416 + $0x1e8] sm:$0xff] %v1154
        %1746 = vst [vmem:[%s416 + $0x1f0] sm:$0xff] %v1183
        %1747 = vst [vmem:[%s416 + $0x1f8] sm:$0xff] %v1212
        %1748 = vst [vmem:[%s416 + $0x200] sm:$0xff] %v1241
        %1749 = vst [vmem:[%s416 + $0x208] sm:$0xff] %v1270
        %1750 = vst [vmem:[%s416 + $0x210] sm:$0xff] %v1299
        %1751 = vst [vmem:[%s416 + $0x218] sm:$0xff] %v1328
        %1752 = vst [vmem:[%s416 + $0x220] sm:$0xff] %v1357
        %1753 = vst [vmem:[%s416 + $0x228] sm:$0xff] %v1386
        %1754 = vst [vmem:[%s416 + $0x230] sm:$0xff] %v1415
        %1755 = vst [vmem:[%s416 + $0x238] sm:$0xff] %v1444
        %1756 = vst [vmem:[%s416 + $0x240] sm:$0xff] %v1473
        %1757 = vst [vmem:[%s416 + $0x248] sm:$0xff] %v1502
        %1758 = vst [vmem:[%s416 + $0x250] sm:$0xff] %v1531
        %1759 = vst [vmem:[%s416 + $0x258] sm:$0xff] %v1560
        %1760 = vst [vmem:[%s416 + $0x260] sm:$0xff] %v1589
        %1761 = vst [vmem:[%s416 + $0x268] sm:$0xff] %v1618
        %1762 = vst [vmem:[%s416 + $0x270] sm:$0xff] %v1647
        %1763 = vst [vmem:[%s416 + $0x278] sm:$0xff] %v1676
        %1764 = vst [vmem:[%s416 + $0x280] sm:$0xff] %v548
        %1765 = vst [vmem:[%s416 + $0x288] sm:$0xff] %v577
        %1766 = vst [vmem:[%s416 + $0x290] sm:$0xff] %v606
        %1767 = vst [vmem:[%s416 + $0x298] sm:$0xff] %v635
        %1768 = vst [vmem:[%s416 + $0x2a0] sm:$0xff] %v664
        %1769 = vst [vmem:[%s416 + $0x2a8] sm:$0xff] %v693
        %1770 = vst [vmem:[%s416 + $0x2b0] sm:$0xff] %v722
        %1771 = vst [vmem:[%s416 + $0x2b8] sm:$0xff] %v751
        %1772 = vst [vmem:[%s416 + $0x2c0] sm:$0xff] %v780
        %1773 = vst [vmem:[%s416 + $0x2c8] sm:$0xff] %v809
        %1774 = vst [vmem:[%s416 + $0x2d0] sm:$0xff] %v838
        %1775 = vst [vmem:[%s416 + $0x2d8] sm:$0xff] %v867
        %1776 = vst [vmem:[%s416 + $0x2e0] sm:$0xff] %v896
        %1777 = vst [vmem:[%s416 + $0x2e8] sm:$0xff] %v925
        %1778 = vst [vmem:[%s416 + $0x2f0] sm:$0xff] %v954
        %1779 = vst [vmem:[%s416 + $0x2f8] sm:$0xff] %v983
        %1780 = vst [vmem:[%s416 + $0x300] sm:$0xff] %v1012
        %1781 = vst [vmem:[%s416 + $0x308] sm:$0xff] %v1041
        %1782 = vst [vmem:[%s416 + $0x310] sm:$0xff] %v1070
        %1783 = vst [vmem:[%s416 + $0x318] sm:$0xff] %v1099
        %1784 = vst [vmem:[%s416 + $0x320] sm:$0xff] %v1128
        %1785 = vst [vmem:[%s416 + $0x328] sm:$0xff] %v1157
        %1786 = vst [vmem:[%s416 + $0x330] sm:$0xff] %v1186
        %1787 = vst [vmem:[%s416 + $0x338] sm:$0xff] %v1215
        %1788 = vst [vmem:[%s416 + $0x340] sm:$0xff] %v1244
        %1789 = vst [vmem:[%s416 + $0x348] sm:$0xff] %v1273
        %1790 = vst [vmem:[%s416 + $0x350] sm:$0xff] %v1302
        %1791 = vst [vmem:[%s416 + $0x358] sm:$0xff] %v1331
        %1792 = vst [vmem:[%s416 + $0x360] sm:$0xff] %v1360
        %1793 = vst [vmem:[%s416 + $0x368] sm:$0xff] %v1389
        %1794 = vst [vmem:[%s416 + $0x370] sm:$0xff] %v1418
        %1795 = vst [vmem:[%s416 + $0x378] sm:$0xff] %v1447
        %1796 = vst [vmem:[%s416 + $0x380] sm:$0xff] %v1476
        %1797 = vst [vmem:[%s416 + $0x388] sm:$0xff] %v1505
        %1798 = vst [vmem:[%s416 + $0x390] sm:$0xff] %v1534
        %1799 = vst [vmem:[%s416 + $0x398] sm:$0xff] %v1563
        %1800 = vst [vmem:[%s416 + $0x3a0] sm:$0xff] %v1592
        %1801 = vst [vmem:[%s416 + $0x3a8] sm:$0xff] %v1621
        %1802 = vst [vmem:[%s416 + $0x3b0] sm:$0xff] %v1650
        %1803 = vst [vmem:[%s416 + $0x3b8] sm:$0xff] %v1679
        %1804 = vst [vmem:[%s416 + $0x3c0] sm:$0xff] %v551
        %1805 = vst [vmem:[%s416 + $0x3c8] sm:$0xff] %v580
        %1806 = vst [vmem:[%s416 + $0x3d0] sm:$0xff] %v609
        %1807 = vst [vmem:[%s416 + $0x3d8] sm:$0xff] %v638
        %1808 = vst [vmem:[%s416 + $0x3e0] sm:$0xff] %v667
        %1809 = vst [vmem:[%s416 + $0x3e8] sm:$0xff] %v696
        %1810 = vst [vmem:[%s416 + $0x3f0] sm:$0xff] %v725
        %1811 = vst [vmem:[%s416 + $0x3f8] sm:$0xff] %v754
        %1812 = vst [vmem:[%s416 + $0x400] sm:$0xff] %v783
        %1813 = vst [vmem:[%s416 + $0x408] sm:$0xff] %v812
        %1814 = vst [vmem:[%s416 + $0x410] sm:$0xff] %v841
        %1815 = vst [vmem:[%s416 + $0x418] sm:$0xff] %v870
        %1816 = vst [vmem:[%s416 + $0x420] sm:$0xff] %v899
        %1817 = vst [vmem:[%s416 + $0x428] sm:$0xff] %v928
        %1818 = vst [vmem:[%s416 + $0x430] sm:$0xff] %v957
        %1819 = vst [vmem:[%s416 + $0x438] sm:$0xff] %v986
        %1820 = vst [vmem:[%s416 + $0x440] sm:$0xff] %v1015
        %1821 = vst [vmem:[%s416 + $0x448] sm:$0xff] %v1044
        %1822 = vst [vmem:[%s416 + $0x450] sm:$0xff] %v1073
        %1823 = vst [vmem:[%s416 + $0x458] sm:$0xff] %v1102
        %1824 = vst [vmem:[%s416 + $0x460] sm:$0xff] %v1131
        %1825 = vst [vmem:[%s416 + $0x468] sm:$0xff] %v1160
        %1826 = vst [vmem:[%s416 + $0x470] sm:$0xff] %v1189
        %1827 = vst [vmem:[%s416 + $0x478] sm:$0xff] %v1218
        %1828 = vst [vmem:[%s416 + $0x480] sm:$0xff] %v1247
        %1829 = vst [vmem:[%s416 + $0x488] sm:$0xff] %v1276
        %1830 = vst [vmem:[%s416 + $0x490] sm:$0xff] %v1305
        %1831 = vst [vmem:[%s416 + $0x498] sm:$0xff] %v1334
        %1832 = vst [vmem:[%s416 + $0x4a0] sm:$0xff] %v1363
        %1833 = vst [vmem:[%s416 + $0x4a8] sm:$0xff] %v1392
        %1834 = vst [vmem:[%s416 + $0x4b0] sm:$0xff] %v1421
        %1835 = vst [vmem:[%s416 + $0x4b8] sm:$0xff] %v1450
        %1836 = vst [vmem:[%s416 + $0x4c0] sm:$0xff] %v1479
        %1837 = vst [vmem:[%s416 + $0x4c8] sm:$0xff] %v1508
        %1838 = vst [vmem:[%s416 + $0x4d0] sm:$0xff] %v1537
        %1839 = vst [vmem:[%s416 + $0x4d8] sm:$0xff] %v1566
        %1840 = vst [vmem:[%s416 + $0x4e0] sm:$0xff] %v1595
        %1841 = vst [vmem:[%s416 + $0x4e8] sm:$0xff] %v1624
        %1842 = vst [vmem:[%s416 + $0x4f0] sm:$0xff] %v1653
        %1843 = vst [vmem:[%s416 + $0x4f8] sm:$0xff] %v1682
        %s1844 = sand.u32 %s68, 1
        %s1845 = sand.u32 %s68, 1
        %s1846 = smul.addr %s1845, 1280
        %s1847 = scalar_lea.vmem [#allocation3], %s1846
        // Predicated region
        $region95: #{xl_positional_encoding_fwd.1} parent=89 // pred_check
          %p1848 = pneg %p78
        $region96: #{xl_positional_encoding_fwd.1} parent=89 // pred_check_branch
          %1850 = sbr.rel (%p1848) target = $region98
        $region97: #{xl_positional_encoding_fwd.1} parent=89 // pred_region
          %s1851 = smul.u32 40, %s13
          %s1852 = ssub.s32 79, %s1851
          %p1853 = scmp.lt.s32.totalorder %s1852, 40
          %s1854 = scalar_select %p1853, %s1852, 40
          %s1855 = smul.u32 32, %s1854
          %p1856 = scmp.ne.s32.totalorder 0, %s1855
          %s1857 = smul.addr %s1851, 8
          %s1858 = scalar_lea.vmem %s2, %s1857
          %s1859 = smul.u32 %s1854, 8
          // Predicated region
          $region99: #{xl_positional_encoding_fwd.1} parent=97 // pred_check
            %p1860 = pneg %p1856
          $region100: #{xl_positional_encoding_fwd.1} parent=97 // pred_check_branch
            %1862 = sbr.rel (%p1860) target = $region102
          $region101: #{xl_positional_encoding_fwd.1} parent=97 // pred_region
            %p1863 = scmp.lt.u32.totalorder %s1859, 8
            %p1864 = pneg %p1863
            // Predicated region
            $region103: #{xl_positional_encoding_fwd.1} parent=101 // pred_check
              _
            $region104: #{xl_positional_encoding_fwd.1} parent=101 // pred_check_branch
              %1866 = sbr.rel (%p1863) target = $region106
            $region105: #{xl_positional_encoding_fwd.1} parent=101 // pred_region
              %s1888 = sand.u32 %s1859, 7
              %p1889 = scmp.eq.s32.totalorder %s1888, 0
              // Predicated region
              $region118: #{xl_positional_encoding_fwd.1} parent=105 // pred_check
                %p1890 = pneg %p1889
              $region119: #{xl_positional_encoding_fwd.1} parent=105 // pred_check_branch
                %1892 = sbr.rel (%p1890) target = $region121
              $region120: #{xl_positional_encoding_fwd.1} parent=105 // pred_region
                %s1893 = sshrl.u32 %s1859, 3
                %s1894 = sshrl.u32 %s1893, 3
                // While loop
                $region122: #{xl_positional_encoding_fwd.1} parent=120 // loop_pre_header
                  _
                $region123: #{xl_positional_encoding_fwd.1} parent=120 // loop_header
                  %s1896 = sphi 0, %s1898
                  %p1897 = scmp.ge.s32.totalorder %s1896, %s1894
                  %s1901 = sphi 0, %s1970
                  %s1902 = sphi %s1847, %s1973
                  %s1903 = sphi %s1858, %s1974
                $region124: #{xl_positional_encoding_fwd.1} parent=120 // loop_header_branch
                  %1900 = sbr.rel (%p1897) target = $region128
                $region125: #{xl_positional_encoding_fwd.1} parent=120 // loop_body
                  %v1904 = vld [vmem:[%s1902] sm:$0xff]
                  %1905 = vst [vmem:[%s1903] sm:$0xff] %v1904
                  %v1906 = vld [vmem:[%s1902 + $0x8] sm:$0xff]
                  %1907 = vst [vmem:[%s1903 + $0x8] sm:$0xff] %v1906
                  %v1908 = vld [vmem:[%s1902 + $0x10] sm:$0xff]
                  %1909 = vst [vmem:[%s1903 + $0x10] sm:$0xff] %v1908
                  %v1910 = vld [vmem:[%s1902 + $0x18] sm:$0xff]
                  %1911 = vst [vmem:[%s1903 + $0x18] sm:$0xff] %v1910
                  %v1912 = vld [vmem:[%s1902 + $0x20] sm:$0xff]
                  %1913 = vst [vmem:[%s1903 + $0x20] sm:$0xff] %v1912
                  %v1914 = vld [vmem:[%s1902 + $0x28] sm:$0xff]
                  %1915 = vst [vmem:[%s1903 + $0x28] sm:$0xff] %v1914
                  %v1916 = vld [vmem:[%s1902 + $0x30] sm:$0xff]
                  %1917 = vst [vmem:[%s1903 + $0x30] sm:$0xff] %v1916
                  %v1918 = vld [vmem:[%s1902 + $0x38] sm:$0xff]
                  %1919 = vst [vmem:[%s1903 + $0x38] sm:$0xff] %v1918
                  %v1920 = vld [vmem:[%s1902 + $0x140] sm:$0xff]
                  %1921 = vst [vmem:[%s1903 + $0x278] sm:$0xff] %v1920
                  %v1922 = vld [vmem:[%s1902 + $0x148] sm:$0xff]
                  %1923 = vst [vmem:[%s1903 + $0x280] sm:$0xff] %v1922
                  %v1924 = vld [vmem:[%s1902 + $0x150] sm:$0xff]
                  %1925 = vst [vmem:[%s1903 + $0x288] sm:$0xff] %v1924
                  %v1926 = vld [vmem:[%s1902 + $0x158] sm:$0xff]
                  %1927 = vst [vmem:[%s1903 + $0x290] sm:$0xff] %v1926
                  %v1928 = vld [vmem:[%s1902 + $0x160] sm:$0xff]
                  %1929 = vst [vmem:[%s1903 + $0x298] sm:$0xff] %v1928
                  %v1930 = vld [vmem:[%s1902 + $0x168] sm:$0xff]
                  %1931 = vst [vmem:[%s1903 + $0x2a0] sm:$0xff] %v1930
                  %v1932 = vld [vmem:[%s1902 + $0x170] sm:$0xff]
                  %1933 = vst [vmem:[%s1903 + $0x2a8] sm:$0xff] %v1932
                  %v1934 = vld [vmem:[%s1902 + $0x178] sm:$0xff]
                  %1935 = vst [vmem:[%s1903 + $0x2b0] sm:$0xff] %v1934
                  %v1936 = vld [vmem:[%s1902 + $0x280] sm:$0xff]
                  %1937 = vst [vmem:[%s1903 + $0x4f0] sm:$0xff] %v1936
                  %v1938 = vld [vmem:[%s1902 + $0x288] sm:$0xff]
                  %1939 = vst [vmem:[%s1903 + $0x4f8] sm:$0xff] %v1938
                  %v1940 = vld [vmem:[%s1902 + $0x290] sm:$0xff]
                  %1941 = vst [vmem:[%s1903 + $0x500] sm:$0xff] %v1940
                  %v1942 = vld [vmem:[%s1902 + $0x298] sm:$0xff]
                  %1943 = vst [vmem:[%s1903 + $0x508] sm:$0xff] %v1942
                  %v1944 = vld [vmem:[%s1902 + $0x2a0] sm:$0xff]
                  %1945 = vst [vmem:[%s1903 + $0x510] sm:$0xff] %v1944
                  %v1946 = vld [vmem:[%s1902 + $0x2a8] sm:$0xff]
                  %1947 = vst [vmem:[%s1903 + $0x518] sm:$0xff] %v1946
                  %v1948 = vld [vmem:[%s1902 + $0x2b0] sm:$0xff]
                  %1949 = vst [vmem:[%s1903 + $0x520] sm:$0xff] %v1948
                  %v1950 = vld [vmem:[%s1902 + $0x2b8] sm:$0xff]
                  %1951 = vst [vmem:[%s1903 + $0x528] sm:$0xff] %v1950
                  %v1952 = vld [vmem:[%s1902 + $0x3c0] sm:$0xff]
                  %1953 = vst [vmem:[%s1903 + $0x768] sm:$0xff] %v1952
                  %v1954 = vld [vmem:[%s1902 + $0x3c8] sm:$0xff]
                  %1955 = vst [vmem:[%s1903 + $0x770] sm:$0xff] %v1954
                  %v1956 = vld [vmem:[%s1902 + $0x3d0] sm:$0xff]
                  %1957 = vst [vmem:[%s1903 + $0x778] sm:$0xff] %v1956
                  %v1958 = vld [vmem:[%s1902 + $0x3d8] sm:$0xff]
                  %1959 = vst [vmem:[%s1903 + $0x780] sm:$0xff] %v1958
                  %v1960 = vld [vmem:[%s1902 + $0x3e0] sm:$0xff]
                  %1961 = vst [vmem:[%s1903 + $0x788] sm:$0xff] %v1960
                  %v1962 = vld [vmem:[%s1902 + $0x3e8] sm:$0xff]
                  %1963 = vst [vmem:[%s1903 + $0x790] sm:$0xff] %v1962
                  %v1964 = vld [vmem:[%s1902 + $0x3f0] sm:$0xff]
                  %1965 = vst [vmem:[%s1903 + $0x798] sm:$0xff] %v1964
                  %v1966 = vld [vmem:[%s1902 + $0x3f8] sm:$0xff]
                  %1967 = vst [vmem:[%s1903 + $0x7a0] sm:$0xff] %v1966
                  %s1968 = sadd.s32 1, %s1901
                  %p1969 = scmp.ge.s32.totalorder %s1968, %s1894
                  %s1970 = scalar_select %p1969, 0, %s1968
                  %s1971 = smul.u32 %s1970, 64
                  %s1972 = smul.u32 %s1970, 64
                  %s1973 = scalar_lea.vmem %s1847, %s1971 [#allocation3]
                  %s1974 = scalar_lea.vmem %s1858, %s1972
                $region126: #{xl_positional_encoding_fwd.1} parent=120 // loop_footer
                  %s1898 = sadd.s32 %s1896, 1
                $region127: #{xl_positional_encoding_fwd.1} parent=120 // loop_footer_branch
                  %1895 = sbr.rel target = $region123
                $region128: #{xl_positional_encoding_fwd.1} parent=120 // loop_exit
                  _
                %s1975 = sshrl.u32 %s1893, 3
                %s1976 = sand.u32 %s1893, 7
                %s1977 = smul.u32 %s1975, 8
                %s1978 = smul.u32 8, %s1977
                %s1979 = scalar_lea.vmem %s1847, %s1978 [#allocation3]
                %s1980 = smul.u32 8, %s1977
                %s1981 = scalar_lea.vmem %s1858, %s1980
                // While loop
                $region129: #{xl_positional_encoding_fwd.1} parent=120 // loop_pre_header
                  _
                $region130: #{xl_positional_encoding_fwd.1} parent=120 // loop_header
                  %s1983 = sphi 0, %s1985
                  %p1984 = scmp.ge.s32.totalorder %s1983, %s1976
                  %s1988 = sphi 0, %s2001
                  %s1989 = sphi %s1979, %s2004
                  %s1990 = sphi %s1981, %s2005
                $region131: #{xl_positional_encoding_fwd.1} parent=120 // loop_header_branch
                  %1987 = sbr.rel (%p1984) target = $region135
                $region132: #{xl_positional_encoding_fwd.1} parent=120 // loop_body
                  %v1991 = vld [vmem:[%s1989] sm:$0xff]
                  %1992 = vst [vmem:[%s1990] sm:$0xff] %v1991
                  %v1993 = vld [vmem:[%s1989 + $0x140] sm:$0xff]
                  %1994 = vst [vmem:[%s1990 + $0x278] sm:$0xff] %v1993
                  %v1995 = vld [vmem:[%s1989 + $0x280] sm:$0xff]
                  %1996 = vst [vmem:[%s1990 + $0x4f0] sm:$0xff] %v1995
                  %v1997 = vld [vmem:[%s1989 + $0x3c0] sm:$0xff]
                  %1998 = vst [vmem:[%s1990 + $0x768] sm:$0xff] %v1997
                  %s1999 = sadd.s32 1, %s1988
                  %p2000 = scmp.ge.s32.totalorder %s1999, %s1976
                  %s2001 = scalar_select %p2000, 0, %s1999
                  %s2002 = smul.u32 %s2001, 8
                  %s2003 = smul.u32 %s2001, 8
                  %s2004 = scalar_lea.vmem %s1979, %s2002 [#allocation3]
                  %s2005 = scalar_lea.vmem %s1981, %s2003
                $region133: #{xl_positional_encoding_fwd.1} parent=120 // loop_footer
                  %s1985 = sadd.s32 %s1983, 1
                $region134: #{xl_positional_encoding_fwd.1} parent=120 // loop_footer_branch
                  %1982 = sbr.rel target = $region130
                $region135: #{xl_positional_encoding_fwd.1} parent=120 // loop_exit
                  _
              $region121: #{xl_positional_encoding_fwd.1} parent=105 // pred_fallthru
                _
              %p2006 = pneg %p1889
              // Predicated region
              $region136: #{xl_positional_encoding_fwd.1} parent=105 // pred_check
                _
              $region137: #{xl_positional_encoding_fwd.1} parent=105 // pred_check_branch
                %2008 = sbr.rel (%p1889) target = $region139
              $region138: #{xl_positional_encoding_fwd.1} parent=105 // pred_region
                %s2009 = sand.u32 %s1859, 7
                %s2010 = ssub.s32 %s1859, %s2009
                %s2011 = scalar_lea.vmem %s1847, %s2010 [#allocation3]
                %s2012 = ssub.s32 %s1859, %s2009
                %s2013 = scalar_lea.vmem %s1858, %s2012
                %s2014 = sshrl.u32 %s1859, 3
                %s2015 = sshrl.u32 %s2014, 3
                // While loop
                $region140: #{xl_positional_encoding_fwd.1} parent=138 // loop_pre_header
                  _
                $region141: #{xl_positional_encoding_fwd.1} parent=138 // loop_header
                  %s2017 = sphi 0, %s2019
                  %p2018 = scmp.ge.s32.totalorder %s2017, %s2015
                  %s2022 = sphi 0, %s2091
                  %s2023 = sphi %s1847, %s2094
                  %s2024 = sphi %s1858, %s2095
                $region142: #{xl_positional_encoding_fwd.1} parent=138 // loop_header_branch
                  %2021 = sbr.rel (%p2018) target = $region146
                $region143: #{xl_positional_encoding_fwd.1} parent=138 // loop_body
                  %v2025 = vld [vmem:[%s2023] sm:$0xff]
                  %2026 = vst [vmem:[%s2024] sm:$0xff] %v2025
                  %v2027 = vld [vmem:[%s2023 + $0x8] sm:$0xff]
                  %2028 = vst [vmem:[%s2024 + $0x8] sm:$0xff] %v2027
                  %v2029 = vld [vmem:[%s2023 + $0x10] sm:$0xff]
                  %2030 = vst [vmem:[%s2024 + $0x10] sm:$0xff] %v2029
                  %v2031 = vld [vmem:[%s2023 + $0x18] sm:$0xff]
                  %2032 = vst [vmem:[%s2024 + $0x18] sm:$0xff] %v2031
                  %v2033 = vld [vmem:[%s2023 + $0x20] sm:$0xff]
                  %2034 = vst [vmem:[%s2024 + $0x20] sm:$0xff] %v2033
                  %v2035 = vld [vmem:[%s2023 + $0x28] sm:$0xff]
                  %2036 = vst [vmem:[%s2024 + $0x28] sm:$0xff] %v2035
                  %v2037 = vld [vmem:[%s2023 + $0x30] sm:$0xff]
                  %2038 = vst [vmem:[%s2024 + $0x30] sm:$0xff] %v2037
                  %v2039 = vld [vmem:[%s2023 + $0x38] sm:$0xff]
                  %2040 = vst [vmem:[%s2024 + $0x38] sm:$0xff] %v2039
                  %v2041 = vld [vmem:[%s2023 + $0x140] sm:$0xff]
                  %2042 = vst [vmem:[%s2024 + $0x278] sm:$0xff] %v2041
                  %v2043 = vld [vmem:[%s2023 + $0x148] sm:$0xff]
                  %2044 = vst [vmem:[%s2024 + $0x280] sm:$0xff] %v2043
                  %v2045 = vld [vmem:[%s2023 + $0x150] sm:$0xff]
                  %2046 = vst [vmem:[%s2024 + $0x288] sm:$0xff] %v2045
                  %v2047 = vld [vmem:[%s2023 + $0x158] sm:$0xff]
                  %2048 = vst [vmem:[%s2024 + $0x290] sm:$0xff] %v2047
                  %v2049 = vld [vmem:[%s2023 + $0x160] sm:$0xff]
                  %2050 = vst [vmem:[%s2024 + $0x298] sm:$0xff] %v2049
                  %v2051 = vld [vmem:[%s2023 + $0x168] sm:$0xff]
                  %2052 = vst [vmem:[%s2024 + $0x2a0] sm:$0xff] %v2051
                  %v2053 = vld [vmem:[%s2023 + $0x170] sm:$0xff]
                  %2054 = vst [vmem:[%s2024 + $0x2a8] sm:$0xff] %v2053
                  %v2055 = vld [vmem:[%s2023 + $0x178] sm:$0xff]
                  %2056 = vst [vmem:[%s2024 + $0x2b0] sm:$0xff] %v2055
                  %v2057 = vld [vmem:[%s2023 + $0x280] sm:$0xff]
                  %2058 = vst [vmem:[%s2024 + $0x4f0] sm:$0xff] %v2057
                  %v2059 = vld [vmem:[%s2023 + $0x288] sm:$0xff]
                  %2060 = vst [vmem:[%s2024 + $0x4f8] sm:$0xff] %v2059
                  %v2061 = vld [vmem:[%s2023 + $0x290] sm:$0xff]
                  %2062 = vst [vmem:[%s2024 + $0x500] sm:$0xff] %v2061
                  %v2063 = vld [vmem:[%s2023 + $0x298] sm:$0xff]
                  %2064 = vst [vmem:[%s2024 + $0x508] sm:$0xff] %v2063
                  %v2065 = vld [vmem:[%s2023 + $0x2a0] sm:$0xff]
                  %2066 = vst [vmem:[%s2024 + $0x510] sm:$0xff] %v2065
                  %v2067 = vld [vmem:[%s2023 + $0x2a8] sm:$0xff]
                  %2068 = vst [vmem:[%s2024 + $0x518] sm:$0xff] %v2067
                  %v2069 = vld [vmem:[%s2023 + $0x2b0] sm:$0xff]
                  %2070 = vst [vmem:[%s2024 + $0x520] sm:$0xff] %v2069
                  %v2071 = vld [vmem:[%s2023 + $0x2b8] sm:$0xff]
                  %2072 = vst [vmem:[%s2024 + $0x528] sm:$0xff] %v2071
                  %v2073 = vld [vmem:[%s2023 + $0x3c0] sm:$0xff]
                  %2074 = vst [vmem:[%s2024 + $0x768] sm:$0xff] %v2073
                  %v2075 = vld [vmem:[%s2023 + $0x3c8] sm:$0xff]
                  %2076 = vst [vmem:[%s2024 + $0x770] sm:$0xff] %v2075
                  %v2077 = vld [vmem:[%s2023 + $0x3d0] sm:$0xff]
                  %2078 = vst [vmem:[%s2024 + $0x778] sm:$0xff] %v2077
                  %v2079 = vld [vmem:[%s2023 + $0x3d8] sm:$0xff]
                  %2080 = vst [vmem:[%s2024 + $0x780] sm:$0xff] %v2079
                  %v2081 = vld [vmem:[%s2023 + $0x3e0] sm:$0xff]
                  %2082 = vst [vmem:[%s2024 + $0x788] sm:$0xff] %v2081
                  %v2083 = vld [vmem:[%s2023 + $0x3e8] sm:$0xff]
                  %2084 = vst [vmem:[%s2024 + $0x790] sm:$0xff] %v2083
                  %v2085 = vld [vmem:[%s2023 + $0x3f0] sm:$0xff]
                  %2086 = vst [vmem:[%s2024 + $0x798] sm:$0xff] %v2085
                  %v2087 = vld [vmem:[%s2023 + $0x3f8] sm:$0xff]
                  %2088 = vst [vmem:[%s2024 + $0x7a0] sm:$0xff] %v2087
                  %s2089 = sadd.s32 1, %s2022
                  %p2090 = scmp.ge.s32.totalorder %s2089, %s2015
                  %s2091 = scalar_select %p2090, 0, %s2089
                  %s2092 = smul.u32 %s2091, 64
                  %s2093 = smul.u32 %s2091, 64
                  %s2094 = scalar_lea.vmem %s1847, %s2092 [#allocation3]
                  %s2095 = scalar_lea.vmem %s1858, %s2093
                $region144: #{xl_positional_encoding_fwd.1} parent=138 // loop_footer
                  %s2019 = sadd.s32 %s2017, 1
                $region145: #{xl_positional_encoding_fwd.1} parent=138 // loop_footer_branch
                  %2016 = sbr.rel target = $region141
                $region146: #{xl_positional_encoding_fwd.1} parent=138 // loop_exit
                  _
                %s2096 = sshrl.u32 %s2014, 3
                %s2097 = sand.u32 %s2014, 7
                %s2098 = smul.u32 %s2096, 8
                %s2099 = smul.u32 8, %s2098
                %s2100 = scalar_lea.vmem %s1847, %s2099 [#allocation3]
                %s2101 = smul.u32 8, %s2098
                %s2102 = scalar_lea.vmem %s1858, %s2101
                // While loop
                $region147: #{xl_positional_encoding_fwd.1} parent=138 // loop_pre_header
                  _
                $region148: #{xl_positional_encoding_fwd.1} parent=138 // loop_header
                  %s2104 = sphi 0, %s2106
                  %p2105 = scmp.ge.s32.totalorder %s2104, %s2097
                  %s2109 = sphi 0, %s2122
                  %s2110 = sphi %s2100, %s2125
                  %s2111 = sphi %s2102, %s2126
                $region149: #{xl_positional_encoding_fwd.1} parent=138 // loop_header_branch
                  %2108 = sbr.rel (%p2105) target = $region153
                $region150: #{xl_positional_encoding_fwd.1} parent=138 // loop_body
                  %v2112 = vld [vmem:[%s2110] sm:$0xff]
                  %2113 = vst [vmem:[%s2111] sm:$0xff] %v2112
                  %v2114 = vld [vmem:[%s2110 + $0x140] sm:$0xff]
                  %2115 = vst [vmem:[%s2111 + $0x278] sm:$0xff] %v2114
                  %v2116 = vld [vmem:[%s2110 + $0x280] sm:$0xff]
                  %2117 = vst [vmem:[%s2111 + $0x4f0] sm:$0xff] %v2116
                  %v2118 = vld [vmem:[%s2110 + $0x3c0] sm:$0xff]
                  %2119 = vst [vmem:[%s2111 + $0x768] sm:$0xff] %v2118
                  %s2120 = sadd.s32 1, %s2109
                  %p2121 = scmp.ge.s32.totalorder %s2120, %s2097
                  %s2122 = scalar_select %p2121, 0, %s2120
                  %s2123 = smul.u32 %s2122, 8
                  %s2124 = smul.u32 %s2122, 8
                  %s2125 = scalar_lea.vmem %s2100, %s2123 [#allocation3]
                  %s2126 = scalar_lea.vmem %s2102, %s2124
                $region151: #{xl_positional_encoding_fwd.1} parent=138 // loop_footer
                  %s2106 = sadd.s32 %s2104, 1
                $region152: #{xl_positional_encoding_fwd.1} parent=138 // loop_footer_branch
                  %2103 = sbr.rel target = $region148
                $region153: #{xl_positional_encoding_fwd.1} parent=138 // loop_exit
                  _
                %s2127 = sshll.u32 1, %s2009
                %s2128 = ssub.s32 %s2127, 1
                loop: start=0, step=1, limit=1
                $region154: #{xl_positional_encoding_fwd.1} parent=138 // loop_pre_header
                  _
                $region155: #{xl_positional_encoding_fwd.1} parent=138 // loop_header
                  %s2130 = sphi 0, %s2134
                  %p2131 = scmp.ge.s32.totalorder %s2130, 1
                  %s2135 = sphi %s2011, %s2011
                  %s2136 = sphi %s2013, %s2013
                $region156: #{xl_positional_encoding_fwd.1} parent=138 // loop_header_branch
                  %2133 = sbr.rel (%p2131) target = $region160
                $region157: #{xl_positional_encoding_fwd.1} parent=138 // loop_body
                  %v2137 = vld [vmem:[%s2135] sm:%s2128]
                  %2138 = vst [vmem:[%s2136] sm:%s2128] %v2137
                  %v2139 = vld [vmem:[%s2135 + $0x140] sm:%s2128]
                  %2140 = vst [vmem:[%s2136 + $0x278] sm:%s2128] %v2139
                  %v2141 = vld [vmem:[%s2135 + $0x280] sm:%s2128]
                  %2142 = vst [vmem:[%s2136 + $0x4f0] sm:%s2128] %v2141
                  %v2143 = vld [vmem:[%s2135 + $0x3c0] sm:%s2128]
                  %2144 = vst [vmem:[%s2136 + $0x768] sm:%s2128] %v2143
                $region158: #{xl_positional_encoding_fwd.1} parent=138 // loop_footer
                  %s2134 = sadd.s32 1, %s2130
                $region159: #{xl_positional_encoding_fwd.1} parent=138 // loop_footer_branch
                  %2129 = sbr.rel target = $region155
                $region160: #{xl_positional_encoding_fwd.1} parent=138 // loop_exit
                  _
              $region139: #{xl_positional_encoding_fwd.1} parent=105 // pred_fallthru
                _
            $region106: #{xl_positional_encoding_fwd.1} parent=101 // pred_fallthru
              _
            // Predicated region
            $region107: #{xl_positional_encoding_fwd.1} parent=101 // pred_check
              %p1867 = pneg %p1863
            $region108: #{xl_positional_encoding_fwd.1} parent=101 // pred_check_branch
              %1869 = sbr.rel (%p1867) target = $region110
            $region109: #{xl_positional_encoding_fwd.1} parent=101 // pred_region
              %s1870 = sshll.u32 1, %s1859
              %s1871 = ssub.s32 %s1870, 1
              loop: start=0, step=1, limit=1
              $region111: #{xl_positional_encoding_fwd.1} parent=109 // loop_pre_header
                _
              $region112: #{xl_positional_encoding_fwd.1} parent=109 // loop_header
                %s1873 = sphi 0, %s1877
                %p1874 = scmp.ge.s32.totalorder %s1873, 1
                %s1878 = sphi %s1847, %s1847
                %s1879 = sphi %s1858, %s1858
              $region113: #{xl_positional_encoding_fwd.1} parent=109 // loop_header_branch
                %1876 = sbr.rel (%p1874) target = $region117
              $region114: #{xl_positional_encoding_fwd.1} parent=109 // loop_body
                %v1880 = vld [vmem:[%s1878] sm:%s1871]
                %1881 = vst [vmem:[%s1879] sm:%s1871] %v1880
                %v1882 = vld [vmem:[%s1878 + $0x140] sm:%s1871]
                %1883 = vst [vmem:[%s1879 + $0x278] sm:%s1871] %v1882
                %v1884 = vld [vmem:[%s1878 + $0x280] sm:%s1871]
                %1885 = vst [vmem:[%s1879 + $0x4f0] sm:%s1871] %v1884
                %v1886 = vld [vmem:[%s1878 + $0x3c0] sm:%s1871]
                %1887 = vst [vmem:[%s1879 + $0x768] sm:%s1871] %v1886
              $region115: #{xl_positional_encoding_fwd.1} parent=109 // loop_footer
                %s1877 = sadd.s32 1, %s1873
              $region116: #{xl_positional_encoding_fwd.1} parent=109 // loop_footer_branch
                %1872 = sbr.rel target = $region112
              $region117: #{xl_positional_encoding_fwd.1} parent=109 // loop_exit
                _
            $region110: #{xl_positional_encoding_fwd.1} parent=101 // pred_fallthru
              _
          $region102: #{xl_positional_encoding_fwd.1} parent=97 // pred_fallthru
            _
          %2145 = vnop
        $region98: #{xl_positional_encoding_fwd.1} parent=89 // pred_fallthru
          _
      $region90: #{xl_positional_encoding_fwd.1} parent=5 // pred_fallthru
        _
      %p2146 = scmp.le.s32.totalorder 2, %s8
      // Predicated region
      $region161: #{xl_positional_encoding_fwd.1} parent=5 // pred_check
        %p2147 = pneg %p2146
      $region162: #{xl_positional_encoding_fwd.1} parent=5 // pred_check_branch
        %2149 = sbr.rel (%p2147) target = $region164
      $region163: #{xl_positional_encoding_fwd.1} parent=5 // pred_region
        %s2150 = ssub.s32 %s8, 2
        // Predicated region
        $region165: #{xl_positional_encoding_fwd.1} parent=163 // pred_check
          %p2151 = pneg %p84
        $region166: #{xl_positional_encoding_fwd.1} parent=163 // pred_check_branch
          %2153 = sbr.rel (%p2151) target = $region168
        $region167: #{xl_positional_encoding_fwd.1} parent=163 // pred_region
          %s2154 = sand.u32 %s69, 1
          %s2155 = sand.u32 %s69, 1
          %s2156 = smul.addr %s2155, 1280
          %s2157 = scalar_lea.vmem [#allocation3], %s2156
        $region168: #{xl_positional_encoding_fwd.1} parent=163 // pred_fallthru
          _
      $region164: #{xl_positional_encoding_fwd.1} parent=5 // pred_fallthru
        _
    $region6: #{xl_positional_encoding_fwd.1} parent=1 // loop_footer
      %s12 = sadd.s32 1, %s8
    $region7: #{xl_positional_encoding_fwd.1} parent=1 // loop_footer_branch
      %7 = sbr.rel target = $region3
    $region8: #{xl_positional_encoding_fwd.1} parent=1 // loop_exit
      _

</llo_original>
